<compile_context>
chip_gen: v5e
topology: v5e:2x2
jax: 0.10.0
libtpu: 0.0.40
codegen_flags: <defaults>
</compile_context>

<pallas_src>
import jax
import jax.numpy as jnp
from jax import lax
from jax.experimental import pallas as pl
from jax.experimental.pallas import tpu as pltpu

# exp(x - rowmax) underflows to exactly 0 for masked entries, matching torch's
# masked_fill(-inf) softmax for rows that are not fully masked, with no -inf/NaN math.
# (A fully masked row yields uniform 1/Lk attention instead of torch's NaN.)
_MASK_VALUE = -1e30


# --------------------------------------------------------------------------- kernels
def _make_full_kernel(inv_temperature, has_mask, return_attn):
    """Whole-Lk kernel: one (TQ, Lk) score tile per grid step."""

    def kernel(*refs):
        if has_mask:
            q_ref, k_ref, v_ref, mask_ref = refs[:4]
            out_refs = refs[4:]
        else:
            q_ref, k_ref, v_ref = refs[:3]
            mask_ref = None
            out_refs = refs[3:]
        if return_attn:
            out_ref, attn_ref = out_refs
        else:
            (out_ref,) = out_refs
            attn_ref = None

        # Pre-scale q: TQ*Dk multiplies instead of scaling the (TQ, Lk) score matrix.
        q = q_ref[...] * inv_temperature          # (TQ, Dk), native dtype
        k = k_ref[...]                            # (Lk, Dk)
        v = v_ref[...]                            # (Lk, Dv)

        # q @ k^T contracting the last dims directly (no XLU transpose), f32 accumulation.
        scores = lax.dot_general(q, k, (((1,), (1,)), ((), ())),
                                 preferred_element_type=jnp.float32)   # (TQ, Lk)
        if has_mask:
            scores = jnp.where(mask_ref[...] != 0, _MASK_VALUE, scores)

        # Numerically stable softmax over keys; stats kept in f32.
        m = jnp.max(scores, axis=-1, keepdims=True)
        e = jnp.exp(scores - m)
        s = jnp.sum(e, axis=-1, keepdims=True)

        if return_attn:
            attn = e * pl.reciprocal(s)           # exact reciprocal
            out = jnp.dot(attn.astype(v.dtype), v, preferred_element_type=jnp.float32)
            attn_ref[...] = attn.astype(attn_ref.dtype)
        else:
            # Deferred normalization: scale the small (TQ, Dv) result, not (TQ, Lk).
            out = jnp.dot(e.astype(v.dtype), v, preferred_element_type=jnp.float32)
            out = out * pl.reciprocal(s)
        out_ref[...] = out.astype(out_ref.dtype)

    return kernel


def _make_flash_kernel(inv_temperature, has_mask):
    """Online-softmax kernel, Lk tiled along an 'arbitrary' grid axis (no attn output)."""

    def kernel(*refs):
        if has_mask:
            q_ref, k_ref, v_ref, mask_ref = refs[:4]
            out_ref, m_sc, l_sc, acc_sc = refs[4:]
        else:
            q_ref, k_ref, v_ref = refs[:3]
            mask_ref = None
            out_ref, m_sc, l_sc, acc_sc = refs[3:]

        kv = pl.program_id(2)

        @pl.when(kv == 0)
        def _init():
            m_sc[...] = jnp.full(m_sc.shape, _MASK_VALUE, dtype=m_sc.dtype)
            l_sc[...] = jnp.zeros(l_sc.shape, dtype=l_sc.dtype)
            acc_sc[...] = jnp.zeros(acc_sc.shape, dtype=acc_sc.dtype)

        q = q_ref[...] * inv_temperature          # (TQ, Dk)
        scores = lax.dot_general(q, k_ref[...], (((1,), (1,)), ((), ())),
                                 preferred_element_type=jnp.float32)   # (TQ, TK)
        if has_mask:
            scores = jnp.where(mask_ref[...] != 0, _MASK_VALUE, scores)

        m_prev = m_sc[...]
        m_new = jnp.maximum(m_prev, jnp.max(scores, axis=-1, keepdims=True))
        alpha = jnp.exp(m_prev - m_new)
        p = jnp.exp(scores - m_new)
        l_sc[...] = alpha * l_sc[...] + jnp.sum(p, axis=-1, keepdims=True)
        acc_sc[...] = alpha * acc_sc[...] + jnp.dot(
            p.astype(v_ref.dtype), v_ref[...], preferred_element_type=jnp.float32)
        m_sc[...] = m_new

        @pl.when(kv == pl.num_programs(2) - 1)
        def _finalize():
            out_ref[...] = (acc_sc[...] * pl.reciprocal(l_sc[...])).astype(out_ref.dtype)

    return kernel


# --------------------------------------------------------------------- sizing helpers
def _vmem_capacity_bytes():
    try:
        return int(pltpu.get_tpu_info().vmem_capacity_bytes)
    except Exception:
        return 64 * 1024 * 1024   # assume the smallest (v7x) part if the query fails


def _vmem_estimate(tq, lk_block, dk, dv, q_item, v_item, has_mask, return_attn,
                   attn_item, kv_buffers, flash):
    """Rough per-step VMEM working-set estimate (bytes) for tile-size budgeting."""
    kv = kv_buffers * lk_block * (dk * q_item + dv * v_item)       # K / V blocks
    blocks = 2 * tq * (dk * q_item + dv * q_item)                  # q + out, double-buffered
    if has_mask:
        blocks += 2 * tq * lk_block                                # int8 mask
    if return_attn:
        blocks += 2 * tq * lk_block * attn_item                    # attn writeback block
    temps = 3 * tq * lk_block * 4                                  # scores / e / attn in f32
    scratch = tq * (dv + 2) * 4 if flash else 0                    # m, l, acc
    return kv + blocks + temps + scratch


def _pick_q_tile(lq, batch, cap, fits):
    """Largest q tile (>=32, <=cap) dividing Lq whose working set fits the budget."""
    cands = [c for c in (1024, 512, 256, 128, 64, 32) if c <= cap]
    if batch == 1:
        # v7x has 2 TensorCores per chip: keep >=2 steps on a parallel axis if possible.
        halved = [c for c in cands if 2 * c <= lq]
        if halved:
            cands = halved
    dividing = [c for c in cands if c <= lq and lq % c == 0]
    for c in dividing:               # descending: largest tile that fits the VMEM budget
        if fits(c):
            return c
    if dividing:
        return dividing[-1]
    return lq                        # tiny Lq: the whole axis as one block is legal


def _pick_k_tile(lk):
    for c in (2048, 1024, 512, 256, 128):
        if 2 * c <= lk and lk % c == 0:
            return c
    return None


# -------------------------------------------------------------------------- wrapper
def scaled_dot_product_attention(q, k, v, mask=None, *, temperature=1.0,
                                 return_attn=True, attn_dtype=jnp.bfloat16):
    """q:[B,Lq,Dk], k:[B,Lk,Dk], v:[B,Lk,Dv], mask:[B,Lq,Lk] (True => masked out).

    Returns (output, attn) like the PyTorch module; attn is None when
    return_attn=False.  attn is written back as bfloat16 by default (it is the
    dominant HBM traffic); pass attn_dtype=jnp.float32 for full precision.
    Fully-masked rows yield uniform 1/Lk attention instead of torch's NaN.
    """
    B, Lq, Dk = q.shape
    _, Lk, _ = k.shape
    _, _, Dv = v.shape
    has_mask = mask is not None
    inv_temperature = 1.0 / float(temperature)

    vmem_cap = _vmem_capacity_bytes()
    large_vmem = vmem_cap >= 128 * 1024 * 1024            # v5e / v6e
    vmem_limit = min(int(0.80 * vmem_cap), 110 * 1024 * 1024)
    budget = int(0.70 * vmem_limit)                       # headroom for compiler scratch

    mask_i8 = mask.astype(jnp.int8) if has_mask else None   # 4x less DMA than int32
    attn_item = jnp.dtype(attn_dtype).itemsize
    q_item = q.dtype.itemsize
    v_item = v.dtype.itemsize

    # Advisory cost estimate so XLA schedules/overlaps around the custom call.
    bytes_accessed = (q.size * q_item + k.size * k.dtype.itemsize + v.size * v_item
                      + B * Lq * Dv * q_item)
    if has_mask:
        bytes_accessed += B * Lq * Lk
    if return_attn:
        bytes_accessed += B * Lq * Lk * attn_item
    cost = pl.CostEstimate(flops=int(2 * B * Lq * Lk * (Dk + Dv)),
                           transcendentals=int(B * Lq * Lk),
                           bytes_accessed=int(bytes_accessed))

    # ---------------- flash path: Lk tiled on an "arbitrary" axis (no attn output) ---
    tk = _pick_k_tile(Lk)
    use_flash = (not return_attn) and Lk >= 512 and tk is not None
    if use_flash:
        tq_cap = 1024 if large_vmem else 256
        fits = lambda c: _vmem_estimate(c, tk, Dk, Dv, q_item, v_item, has_mask,
                                        False, attn_item, 2, True) <= budget
        TQ = _pick_q_tile(Lq, B, tq_cap, fits)
        grid = (B, Lq // TQ, Lk // tk)
        kernel = _make_flash_kernel(inv_temperature, has_mask)

        in_specs = [
            pl.BlockSpec((None, TQ, Dk), lambda b, i, j: (b, i, 0)),
            pl.BlockSpec((None, tk, Dk), lambda b, i, j: (b, j, 0)),
            pl.BlockSpec((None, tk, Dv), lambda b, i, j: (b, j, 0)),
        ]
        inputs = [q, k, v]
        if has_mask:
            in_specs.append(pl.BlockSpec((None, TQ, tk), lambda b, i, j: (b, i, j)))
            inputs.append(mask_i8)

        out = pl.pallas_call(
            kernel,
            out_shape=jax.ShapeDtypeStruct((B, Lq, Dv), q.dtype),
            grid=grid,
            in_specs=in_specs,
            out_specs=pl.BlockSpec((None, TQ, Dv), lambda b, i, j: (b, i, 0)),
            scratch_shapes=[pltpu.VMEM((TQ, 1), jnp.float32),   # running max m
                            pltpu.VMEM((TQ, 1), jnp.float32),   # running sum l
                            pltpu.VMEM((TQ, Dv), jnp.float32)], # running acc
            compiler_params=pltpu.CompilerParams(
                dimension_semantics=("parallel", "parallel", "arbitrary"),
                vmem_limit_bytes=vmem_limit),
            cost_estimate=cost,
        )(*inputs)
        return out, None

    # ---------------- full-Lk path (returns attn, or small Lk) ----------------------
    if large_vmem:
        tq_cap = 1024
    else:
        tq_cap = 256 if (has_mask or return_attn or Lk > 2048) else 512

    def build(kv_single_buffer):
        kv_buffers = 1 if kv_single_buffer else 2
        fits = lambda c: _vmem_estimate(c, Lk, Dk, Dv, q_item, v_item, has_mask,
                                        return_attn, attn_item, kv_buffers,
                                        False) <= budget
        TQ = _pick_q_tile(Lq, B, tq_cap, fits)
        grid = (B, Lq // TQ)
        kernel = _make_full_kernel(inv_temperature, has_mask, return_attn)

        def kv_spec(block_shape, index_map):
            if kv_single_buffer:
                # K/V block index only changes with the batch axis: single-buffer them
                # to halve their VMEM footprint (no overlap lost; refetch is once per B).
                return pl.BlockSpec(block_shape, index_map, pipeline_mode=pl.Buffered(1))
            return pl.BlockSpec(block_shape, index_map)

        in_specs = [
            pl.BlockSpec((None, TQ, Dk), lambda b, i: (b, i, 0)),   # q: tiled over Lq
            kv_spec((None, Lk, Dk), lambda b, i: (b, 0, 0)),        # k: resident per batch
            kv_spec((None, Lk, Dv), lambda b, i: (b, 0, 0)),        # v: resident per batch
        ]
        inputs = [q, k, v]
        if has_mask:
            in_specs.append(pl.BlockSpec((None, TQ, Lk), lambda b, i: (b, i, 0)))
            inputs.append(mask_i8)

        out_shape = [jax.ShapeDtypeStruct((B, Lq, Dv), q.dtype)]
        out_specs = [pl.BlockSpec((None, TQ, Dv), lambda b, i: (b, i, 0))]
        if return_attn:
            out_shape.append(jax.ShapeDtypeStruct((B, Lq, Lk), attn_dtype))
            out_specs.append(pl.BlockSpec((None, TQ, Lk), lambda b, i: (b, i, 0)))

        return pl.pallas_call(
            kernel,
            out_shape=tuple(out_shape),
            grid=grid,
            in_specs=in_specs,
            out_specs=tuple(out_specs),
            compiler_params=pltpu.CompilerParams(
                dimension_semantics=("parallel", "parallel"),
                vmem_limit_bytes=vmem_limit),
            cost_estimate=cost,
        )(*inputs)

    try:
        results = build(kv_single_buffer=True)
    except Exception:
        # pl.Buffered(1) not supported on this JAX/Mosaic build: fall back to the
        # default double-buffered K/V specs (correctness is unaffected).
        results = build(kv_single_buffer=False)

    if return_attn:
        out, attn = results
        return out, attn
    return results[0], None


# ------------------------------------------------------------------------- reference
def _reference(q, k, v, mask, temperature):
    attn = jnp.einsum("bqd,bkd->bqk", q, k) / temperature
    if mask is not None:
        attn = jnp.where(mask, -jnp.inf, attn)
    attn = jax.nn.softmax(attn, axis=2)
    out = jnp.einsum("bqk,bkd->bqd", attn, v)
    return out, attn


if __name__ == "__main__":
    # ---------------- small full-Lk path (returns attention, like the module) -------
    B, Lq, Lk, Dk, Dv = 2, 8, 8, 32, 32
    temperature = float(Dk) ** 0.5
    kq, kk, kv, km = jax.random.split(jax.random.PRNGKey(0), 4)
    q = jax.random.normal(kq, (B, Lq, Dk), jnp.float32)
    k = jax.random.normal(kk, (B, Lk, Dk), jnp.float32)
    v = jax.random.normal(kv, (B, Lk, Dv), jnp.float32)
    mask = jax.random.bernoulli(km, 0.3, (B, Lq, Lk))
    mask = mask.at[:, :, 0].set(False)        # keep every row at least partly unmasked

    # Tolerances cover TPU default matmul precision plus the bf16 attn writeback.
    out, attn = scaled_dot_product_attention(q, k, v, mask, temperature=temperature)
    jax.block_until_ready((out, attn))
    ref_out, ref_attn = _reference(q, k, v, mask, temperature)
    assert jnp.allclose(out, ref_out, atol=2e-2, rtol=2e-2), "masked output mismatch"
    assert jnp.allclose(attn.astype(jnp.float32), ref_attn, atol=2e-2, rtol=2e-2), \
        "masked attn mismatch"

    out_nm, attn_nm = scaled_dot_product_attention(q, k, v, None, temperature=temperature)
    jax.block_until_ready((out_nm, attn_nm))
    ref_out_nm, ref_attn_nm = _reference(q, k, v, None, temperature)
    assert jnp.allclose(out_nm, ref_out_nm, atol=2e-2, rtol=2e-2), "no-mask output mismatch"
    assert jnp.allclose(attn_nm.astype(jnp.float32), ref_attn_nm, atol=2e-2, rtol=2e-2), \
        "no-mask attn mismatch"

    # ---------------- flash-style Lk-tiled path (return_attn=False, longer keys) ----
    B2, Lq2, Lk2, D2 = 2, 128, 512, 64
    temperature2 = float(D2) ** 0.5
    kq2, kk2, kv2, km2 = jax.random.split(jax.random.PRNGKey(1), 4)
    q2 = jax.random.normal(kq2, (B2, Lq2, D2), jnp.float32)
    k2 = jax.random.normal(kk2, (B2, Lk2, D2), jnp.float32)
    v2 = jax.random.normal(kv2, (B2, Lk2, D2), jnp.float32)
    mask2 = jax.random.bernoulli(km2, 0.3, (B2, Lq2, Lk2))
    mask2 = mask2.at[:, :, 0].set(False)

    out2, attn2 = scaled_dot_product_attention(q2, k2, v2, mask2,
                                               temperature=temperature2,
                                               return_attn=False)
    jax.block_until_ready(out2)
    assert attn2 is None
    ref_out2, _ = _reference(q2, k2, v2, mask2, temperature2)
    assert jnp.allclose(out2, ref_out2, atol=2e-2, rtol=2e-2), "flash masked output mismatch"

    out3, _ = scaled_dot_product_attention(q2, k2, v2, None,
                                           temperature=temperature2,
                                           return_attn=False)
    jax.block_until_ready(out3)
    ref_out3, _ = _reference(q2, k2, v2, None, temperature2)
    assert jnp.allclose(out3, ref_out3, atol=2e-2, rtol=2e-2), "flash no-mask output mismatch"

    print("KERNEL_OK")
</pallas_src>

<mosaic_0001>
module attributes {stable_mosaic.version = 11 : i64} {
  func.func @kernel(%arg0: i32, %arg1: i32, %arg2: memref<1x8x32xf32, #tpu.memory_space<vmem>>, %arg3: memref<1x8x32xf32, #tpu.memory_space<vmem>>, %arg4: memref<1x8x32xf32, #tpu.memory_space<vmem>>, %arg5: memref<1x8x8xi8, #tpu.memory_space<vmem>>, %arg6: memref<1x8x32xf32, #tpu.memory_space<vmem>>, %arg7: memref<1x8x8xbf16, #tpu.memory_space<vmem>>) attributes {dimension_semantics = [#tpu.dimension_semantics<parallel>, #tpu.dimension_semantics<parallel>], iteration_bounds = array<i64: 2, 1>, scalar_prefetch = 0 : i64, scratch_operands = 0 : i64, tpu.core_type = #tpu.core_type<tc>, window_params = [{transform_indices = @transform_0, window_bounds = array<i64: 1, 8, 32>}, {pipeline_mode = #tpu.pipeline_mode<synchronous>, transform_indices = @transform_1, window_bounds = array<i64: 1, 8, 32>}, {pipeline_mode = #tpu.pipeline_mode<synchronous>, transform_indices = @transform_2, window_bounds = array<i64: 1, 8, 32>}, {transform_indices = @transform_3, window_bounds = array<i64: 1, 8, 8>}, {transform_indices = @transform_4, window_bounds = array<i64: 1, 8, 32>}, {transform_indices = @transform_5, window_bounds = array<i64: 1, 8, 8>}]} {
    %c0 = arith.constant 0 : index
    %c0_0 = arith.constant 0 : index
    %c0_1 = arith.constant 0 : index
    %0 = vector.load %arg2[%c0, %c0_0, %c0_1] : memref<1x8x32xf32, #tpu.memory_space<vmem>>, vector<1x8x32xf32>
    %1 = vector.shape_cast %0 : vector<1x8x32xf32> to vector<8x32xf32>
    %cst = arith.constant 0.176776692 : f32
    %2 = vector.broadcast %cst : f32 to vector<8x32xf32>
    %3 = arith.mulf %1, %2 : vector<8x32xf32>
    %c0_2 = arith.constant 0 : index
    %c0_3 = arith.constant 0 : index
    %c0_4 = arith.constant 0 : index
    %4 = vector.load %arg3[%c0_2, %c0_3, %c0_4] : memref<1x8x32xf32, #tpu.memory_space<vmem>>, vector<1x8x32xf32>
    %5 = vector.shape_cast %4 : vector<1x8x32xf32> to vector<8x32xf32>
    %c0_5 = arith.constant 0 : index
    %c0_6 = arith.constant 0 : index
    %c0_7 = arith.constant 0 : index
    %6 = vector.load %arg4[%c0_5, %c0_6, %c0_7] : memref<1x8x32xf32, #tpu.memory_space<vmem>>, vector<1x8x32xf32>
    %7 = vector.shape_cast %6 : vector<1x8x32xf32> to vector<8x32xf32>
    %cst_8 = arith.constant dense<0.000000e+00> : vector<8x8xf32>
    %8 = tpu.matmul %3, %5, %cst_8 {dimension_numbers = #tpu.dot_dimension_numbers<[1], [1], [0], [0], [0, 0, 1, 0], [], []>} : vector<8x32xf32>, vector<8x32xf32>, vector<8x8xf32> -> vector<8x8xf32>
    %c0_9 = arith.constant 0 : index
    %c0_10 = arith.constant 0 : index
    %c0_11 = arith.constant 0 : index
    %9 = vector.load %arg5[%c0_9, %c0_10, %c0_11] : memref<1x8x8xi8, #tpu.memory_space<vmem>>, vector<1x8x8xi8>
    %10 = vector.shape_cast %9 : vector<1x8x8xi8> to vector<8x8xi8>
    %c0_i8 = arith.constant 0 : i8
    %11 = vector.broadcast %c0_i8 : i8 to vector<8x8xi8>
    %12 = arith.cmpi ne, %10, %11 : vector<8x8xi8>
    %cst_12 = arith.constant -1.000000e+30 : f32
    %13 = vector.broadcast %cst_12 : f32 to vector<8x8xf32>
    %14 = arith.select %12, %13, %8 : vector<8x8xi1>, vector<8x8xf32>
    %cst_13 = arith.constant dense<0xFF800000> : vector<8xf32>
    %15 = vector.multi_reduction <maximumf>, %14, %cst_13 [1] : vector<8x8xf32> to vector<8xf32>
    %16 = vector.shape_cast %15 : vector<8xf32> to vector<8x1xf32>
    %17 = vector.broadcast %16 : vector<8x1xf32> to vector<8x8xf32>
    %18 = arith.subf %14, %17 : vector<8x8xf32>
    %19 = math.exp %18 : vector<8x8xf32>
    %cst_14 = arith.constant dense<0.000000e+00> : vector<8xf32>
    %20 = vector.multi_reduction <add>, %19, %cst_14 [1] : vector<8x8xf32> to vector<8xf32>
    %21 = vector.shape_cast %20 : vector<8xf32> to vector<8x1xf32>
    %22 = tpu.reciprocal %21 : vector<8x1xf32> -> vector<8x1xf32>
    %23 = vector.broadcast %22 : vector<8x1xf32> to vector<8x8xf32>
    %24 = arith.mulf %19, %23 : vector<8x8xf32>
    %cst_15 = arith.constant dense<0.000000e+00> : vector<8x32xf32>
    %25 = tpu.matmul %24, %7, %cst_15 {dimension_numbers = #tpu.dot_dimension_numbers<[1], [0], [0], [1], [0, 0, 1, 1], [], []>} : vector<8x8xf32>, vector<8x32xf32>, vector<8x32xf32> -> vector<8x32xf32>
    %26 = arith.truncf %24 : vector<8x8xf32> to vector<8x8xbf16>
    %c0_16 = arith.constant 0 : index
    %c0_17 = arith.constant 0 : index
    %c0_18 = arith.constant 0 : index
    %27 = vector.load %arg7[%c0_16, %c0_17, %c0_18] : memref<1x8x8xbf16, #tpu.memory_space<vmem>>, vector<1x8x8xbf16>
    %28 = vector.shape_cast %27 : vector<1x8x8xbf16> to vector<8x8xbf16>
    %29 = vector.shape_cast %26 : vector<8x8xbf16> to vector<1x8x8xbf16>
    tpu.vector_store %arg7[%c0_16, %c0_17, %c0_18], %29 {strides = array<i32>} : memref<1x8x8xbf16, #tpu.memory_space<vmem>>, vector<1x8x8xbf16>,
    %c0_19 = arith.constant 0 : index
    %c0_20 = arith.constant 0 : index
    %c0_21 = arith.constant 0 : index
    %30 = vector.load %arg6[%c0_19, %c0_20, %c0_21] : memref<1x8x32xf32, #tpu.memory_space<vmem>>, vector<1x8x32xf32>
    %31 = vector.shape_cast %30 : vector<1x8x32xf32> to vector<8x32xf32>
    %32 = vector.shape_cast %25 : vector<8x32xf32> to vector<1x8x32xf32>
    tpu.vector_store %arg6[%c0_19, %c0_20, %c0_21], %32 {strides = array<i32>} : memref<1x8x32xf32, #tpu.memory_space<vmem>>, vector<1x8x32xf32>,
    return
  }
  func.func @transform_0(%arg0: i32, %arg1: i32) -> (i32, i32, i32) {
    %c0_i32 = arith.constant 0 : i32
    %c0_i32_0 = arith.constant 0 : i32
    return %arg0, %arg1, %c0_i32 : i32, i32, i32
  }
  func.func @transform_1(%arg0: i32, %arg1: i32) -> (i32, i32, i32) {
    %c0_i32 = arith.constant 0 : i32
    %c0_i32_0 = arith.constant 0 : i32
    %c0_i32_1 = arith.constant 0 : i32
    return %arg0, %c0_i32, %c0_i32_0 : i32, i32, i32
  }
  func.func @transform_2(%arg0: i32, %arg1: i32) -> (i32, i32, i32) {
    %c0_i32 = arith.constant 0 : i32
    %c0_i32_0 = arith.constant 0 : i32
    %c0_i32_1 = arith.constant 0 : i32
    return %arg0, %c0_i32, %c0_i32_0 : i32, i32, i32
  }
  func.func @transform_3(%arg0: i32, %arg1: i32) -> (i32, i32, i32) {
    %c0_i32 = arith.constant 0 : i32
    %c0_i32_0 = arith.constant 0 : i32
    return %arg0, %arg1, %c0_i32 : i32, i32, i32
  }
  func.func @transform_4(%arg0: i32, %arg1: i32) -> (i32, i32, i32) {
    %c0_i32 = arith.constant 0 : i32
    %c0_i32_0 = arith.constant 0 : i32
    return %arg0, %arg1, %c0_i32 : i32, i32, i32
  }
  func.func @transform_5(%arg0: i32, %arg1: i32) -> (i32, i32, i32) {
    %c0_i32 = arith.constant 0 : i32
    %c0_i32_0 = arith.constant 0 : i32
    return %arg0, %arg1, %c0_i32 : i32, i32, i32
  }
}

module attributes {stable_mosaic.version = 11 : i64} {
  func.func @kernel(%arg0: i32, %arg1: i32, %arg2: memref<1x8x32xf32, #tpu.memory_space<vmem>>, %arg3: memref<1x8x32xf32, #tpu.memory_space<vmem>>, %arg4: memref<1x8x32xf32, #tpu.memory_space<vmem>>, %arg5: memref<1x8x8xi8, #tpu.memory_space<vmem>>, %arg6: memref<1x8x32xf32, #tpu.memory_space<vmem>>, %arg7: memref<1x8x8xbf16, #tpu.memory_space<vmem>>) attributes {dimension_semantics = [#tpu.dimension_semantics<parallel>, #tpu.dimension_semantics<parallel>], iteration_bounds = array<i64: 2, 1>, scalar_prefetch = 0 : i64, scratch_operands = 0 : i64, tpu.core_type = #tpu.core_type<tc>, window_params = [{transform_indices = @transform_0, window_bounds = array<i64: 1, 8, 32>}, {transform_indices = @transform_1, window_bounds = array<i64: 1, 8, 32>}, {transform_indices = @transform_2, window_bounds = array<i64: 1, 8, 32>}, {transform_indices = @transform_3, window_bounds = array<i64: 1, 8, 8>}, {transform_indices = @transform_4, window_bounds = array<i64: 1, 8, 32>}, {transform_indices = @transform_5, window_bounds = array<i64: 1, 8, 8>}]} {
    %c0 = arith.constant 0 : index
    %c0_0 = arith.constant 0 : index
    %c0_1 = arith.constant 0 : index
    %0 = vector.load %arg2[%c0, %c0_0, %c0_1] : memref<1x8x32xf32, #tpu.memory_space<vmem>>, vector<1x8x32xf32>
    %1 = vector.shape_cast %0 : vector<1x8x32xf32> to vector<8x32xf32>
    %cst = arith.constant 0.176776692 : f32
    %2 = vector.broadcast %cst : f32 to vector<8x32xf32>
    %3 = arith.mulf %1, %2 : vector<8x32xf32>
    %c0_2 = arith.constant 0 : index
    %c0_3 = arith.constant 0 : index
    %c0_4 = arith.constant 0 : index
    %4 = vector.load %arg3[%c0_2, %c0_3, %c0_4] : memref<1x8x32xf32, #tpu.memory_space<vmem>>, vector<1x8x32xf32>
    %5 = vector.shape_cast %4 : vector<1x8x32xf32> to vector<8x32xf32>
    %c0_5 = arith.constant 0 : index
    %c0_6 = arith.constant 0 : index
    %c0_7 = arith.constant 0 : index
    %6 = vector.load %arg4[%c0_5, %c0_6, %c0_7] : memref<1x8x32xf32, #tpu.memory_space<vmem>>, vector<1x8x32xf32>
    %7 = vector.shape_cast %6 : vector<1x8x32xf32> to vector<8x32xf32>
    %cst_8 = arith.constant dense<0.000000e+00> : vector<8x8xf32>
    %8 = tpu.matmul %3, %5, %cst_8 {dimension_numbers = #tpu.dot_dimension_numbers<[1], [1], [0], [0], [0, 0, 1, 0], [], []>} : vector<8x32xf32>, vector<8x32xf32>, vector<8x8xf32> -> vector<8x8xf32>
    %c0_9 = arith.constant 0 : index
    %c0_10 = arith.constant 0 : index
    %c0_11 = arith.constant 0 : index
    %9 = vector.load %arg5[%c0_9, %c0_10, %c0_11] : memref<1x8x8xi8, #tpu.memory_space<vmem>>, vector<1x8x8xi8>
    %10 = vector.shape_cast %9 : vector<1x8x8xi8> to vector<8x8xi8>
    %c0_i8 = arith.constant 0 : i8
    %11 = vector.broadcast %c0_i8 : i8 to vector<8x8xi8>
    %12 = arith.cmpi ne, %10, %11 : vector<8x8xi8>
    %cst_12 = arith.constant -1.000000e+30 : f32
    %13 = vector.broadcast %cst_12 : f32 to vector<8x8xf32>
    %14 = arith.select %12, %13, %8 : vector<8x8xi1>, vector<8x8xf32>
    %cst_13 = arith.constant dense<0xFF800000> : vector<8xf32>
    %15 = vector.multi_reduction <maximumf>, %14, %cst_13 [1] : vector<8x8xf32> to vector<8xf32>
    %16 = vector.shape_cast %15 : vector<8xf32> to vector<8x1xf32>
    %17 = vector.broadcast %16 : vector<8x1xf32> to vector<8x8xf32>
    %18 = arith.subf %14, %17 : vector<8x8xf32>
    %19 = math.exp %18 : vector<8x8xf32>
    %cst_14 = arith.constant dense<0.000000e+00> : vector<8xf32>
    %20 = vector.multi_reduction <add>, %19, %cst_14 [1] : vector<8x8xf32> to vector<8xf32>
    %21 = vector.shape_cast %20 : vector<8xf32> to vector<8x1xf32>
    %22 = tpu.reciprocal %21 : vector<8x1xf32> -> vector<8x1xf32>
    %23 = vector.broadcast %22 : vector<8x1xf32> to vector<8x8xf32>
    %24 = arith.mulf %19, %23 : vector<8x8xf32>
    %cst_15 = arith.constant dense<0.000000e+00> : vector<8x32xf32>
    %25 = tpu.matmul %24, %7, %cst_15 {dimension_numbers = #tpu.dot_dimension_numbers<[1], [0], [0], [1], [0, 0, 1, 1], [], []>} : vector<8x8xf32>, vector<8x32xf32>, vector<8x32xf32> -> vector<8x32xf32>
    %26 = arith.truncf %24 : vector<8x8xf32> to vector<8x8xbf16>
    %c0_16 = arith.constant 0 : index
    %c0_17 = arith.constant 0 : index
    %c0_18 = arith.constant 0 : index
    %27 = vector.load %arg7[%c0_16, %c0_17, %c0_18] : memref<1x8x8xbf16, #tpu.memory_space<vmem>>, vector<1x8x8xbf16>
    %28 = vector.shape_cast %27 : vector<1x8x8xbf16> to vector<8x8xbf16>
    %29 = vector.shape_cast %26 : vector<8x8xbf16> to vector<1x8x8xbf16>
    tpu.vector_store %arg7[%c0_16, %c0_17, %c0_18], %29 {strides = array<i32>} : memref<1x8x8xbf16, #tpu.memory_space<vmem>>, vector<1x8x8xbf16>,
    %c0_19 = arith.constant 0 : index
    %c0_20 = arith.constant 0 : index
    %c0_21 = arith.constant 0 : index
    %30 = vector.load %arg6[%c0_19, %c0_20, %c0_21] : memref<1x8x32xf32, #tpu.memory_space<vmem>>, vector<1x8x32xf32>
    %31 = vector.shape_cast %30 : vector<1x8x32xf32> to vector<8x32xf32>
    %32 = vector.shape_cast %25 : vector<8x32xf32> to vector<1x8x32xf32>
    tpu.vector_store %arg6[%c0_19, %c0_20, %c0_21], %32 {strides = array<i32>} : memref<1x8x32xf32, #tpu.memory_space<vmem>>, vector<1x8x32xf32>,
    return
  }
  func.func @transform_0(%arg0: i32, %arg1: i32) -> (i32, i32, i32) {
    %c0_i32 = arith.constant 0 : i32
    %c0_i32_0 = arith.constant 0 : i32
    return %arg0, %arg1, %c0_i32 : i32, i32, i32
  }
  func.func @transform_1(%arg0: i32, %arg1: i32) -> (i32, i32, i32) {
    %c0_i32 = arith.constant 0 : i32
    %c0_i32_0 = arith.constant 0 : i32
    %c0_i32_1 = arith.constant 0 : i32
    return %arg0, %c0_i32, %c0_i32_0 : i32, i32, i32
  }
  func.func @transform_2(%arg0: i32, %arg1: i32) -> (i32, i32, i32) {
    %c0_i32 = arith.constant 0 : i32
    %c0_i32_0 = arith.constant 0 : i32
    %c0_i32_1 = arith.constant 0 : i32
    return %arg0, %c0_i32, %c0_i32_0 : i32, i32, i32
  }
  func.func @transform_3(%arg0: i32, %arg1: i32) -> (i32, i32, i32) {
    %c0_i32 = arith.constant 0 : i32
    %c0_i32_0 = arith.constant 0 : i32
    return %arg0, %arg1, %c0_i32 : i32, i32, i32
  }
  func.func @transform_4(%arg0: i32, %arg1: i32) -> (i32, i32, i32) {
    %c0_i32 = arith.constant 0 : i32
    %c0_i32_0 = arith.constant 0 : i32
    return %arg0, %arg1, %c0_i32 : i32, i32, i32
  }
  func.func @transform_5(%arg0: i32, %arg1: i32) -> (i32, i32, i32) {
    %c0_i32 = arith.constant 0 : i32
    %c0_i32_0 = arith.constant 0 : i32
    return %arg0, %arg1, %c0_i32 : i32, i32, i32
  }
}

</mosaic_0001>

<llo_original>
// kernel: tpu_custom_call.1
$region0: #{tpu_custom_call.1}
  #allocation0 [shape = 'u32[]', space=smem, size = 0x4, offset = 0x4, fixed_abs, tag = 'smem constant byte address 0x4 - core index']
  #allocation1 [shape = 'u32[72,128]{1,0:T(1,128)}', space=vmem, size = 0x9000, scoped, tag = 'internal scratch']
  %s0 = inlined_call_operand.hbm [shape: f32[2,8,32], index: 0, kind: input, shape index: {}]
  %s1 = inlined_call_operand.hbm [shape: f32[2,8,32], index: 1, kind: input, shape index: {}]
  %s2 = inlined_call_operand.hbm [shape: f32[2,8,32], index: 2, kind: input, shape index: {}]
  %s3 = inlined_call_operand.hbm [shape: s8[2,8,8], index: 3, kind: input, shape index: {}]
  %s4 = inlined_call_operand.hbm [shape: f32[2,8,32], index: 4, kind: output, shape index: {0}]
  %s5 = inlined_call_operand.hbm [shape: bf16[2,8,8], index: 5, kind: output, shape index: {1}]
  %6 = xla_tuple %s4, %s5
  %s7 = sld [smem:[#allocation0]]
  $region73: #{tpu_custom_call.1} parent=0
    _
  %s9 = ssub.s32 1, %s7
  %s10 = scalar_select 0, %s9, %s7
  $region1: #{tpu_custom_call.1} parent=0
    #allocation2 [shape = 'u8[8192]{0}', space=vmem, size = 0x2000, scoped, tag = 'input window, operand 0']
    #allocation3 [shape = 's32[2]{0}', space=sflag, size = 0x8, scoped, tag = 'scoped memory for tpu_custom_call.1']
    #allocation4 [shape = 's32[2]{0}', space=sflag, size = 0x8, scoped, tag = 'scoped memory for tpu_custom_call.1']
    #allocation5 [shape = 'u8[4096]{0}', space=vmem, size = 0x1000, scoped, tag = 'input window, operand 1, single buffered']
    #allocation6 [shape = 's32[1]{0}', space=sflag, size = 0x4, scoped, tag = 'scoped memory for tpu_custom_call.1']
    #allocation7 [shape = 'u8[4096]{0}', space=vmem, size = 0x1000, scoped, tag = 'input window, operand 2, single buffered']
    #allocation8 [shape = 'u8[2048]{0}', space=vmem, size = 0x800, scoped, tag = 'input window, operand 3']
    #allocation9 [shape = 's32[2]{0}', space=sflag, size = 0x8, scoped, tag = 'scoped memory for tpu_custom_call.1']
    #allocation10 [shape = 'u8[8192]{0}', space=vmem, size = 0x2000, scoped, tag = 'output window, operand 0']
    #allocation11 [shape = 'u8[4096]{0}', space=vmem, size = 0x1000, scoped, tag = 'output window, operand 1']
    #allocation12 [shape = 's32[2]{0}', space=sflag, size = 0x8, scoped, tag = 'scoped memory for tpu_custom_call.1']
    %11 = vsyncpa [#allocation3], 0
    %s12 = scalar_lea.sflag [#allocation3], 1
    %13 = vsyncpa %s12, 0
    %14 = vsyncpa [#allocation6], 0
    %15 = vsyncpa [#allocation9], 0
    %s16 = scalar_lea.sflag [#allocation9], 1
    %17 = vsyncpa %s16, 0
    %18 = vsyncpa [#allocation4], 0
    %s19 = scalar_lea.sflag [#allocation4], 1
    %20 = vsyncpa %s19, 0
    %21 = vsyncpa [#allocation12], 0
    %s22 = scalar_lea.sflag [#allocation12], 1
    %23 = vsyncpa %s22, 0
    loop: start=0, step=1, limit=4
    $region2: #{tpu_custom_call.1} parent=1 // loop_pre_header
      _
    $region3: #{tpu_custom_call.1} parent=1 // loop_header
      %s25 = sphi 0, %s29
      %p26 = scmp.ge.s32.totalorder %s25, 4
      %s32 = sphi 0, %s44
      %s33 = sphi 0, %s40
      %s34 = sphi 0, %s32
      %s35 = sphi 0, %s33
      %s36 = sphi 0, %s34
      %s37 = sphi 0, %s35
      %s49 = sphi 0, %s51
      %s52 = sphi 0, %s49
      %s53 = sphi 0, %s52
      %s69 = sphi 0, %s53
      %s75 = sphi 0, %s77
      %s78 = sphi 0, %s75
      %s79 = sphi 0, %s78
      %s95 = sphi 0, %s79
      %s101 = sphi 0, %s103
      %s104 = sphi 0, %s101
      %s105 = sphi 0, %s104
      %s121 = sphi 0, %s105
      %s129 = sphi 0, %s131
      %s132 = sphi 0, %s129
      %s133 = sphi 0, %s132
      %s149 = sphi 0, %s133
      %s157 = sphi 0, %s159
      %s160 = sphi 0, %s157
      %s161 = sphi 0, %s160
      %s177 = sphi 0, %s161
      %s185 = sphi 0, %s187
      %s188 = sphi 0, %s185
      %s189 = sphi 0, %s188
      %s205 = sphi 0, %s189
    $region4: #{tpu_custom_call.1} parent=1 // loop_header_branch
      %28 = sbr.rel (%p26) target = $region8
    $region5: #{tpu_custom_call.1} parent=1 // loop_body
      %s30 = ssub.s32 %s25, 1
      %s31 = ssub.s32 %s25, 2
      %s38 = sadd.s32 1, %s33
      %p39 = scmp.ge.s32.totalorder %s38, 1
      %s40 = scalar_select %p39, 0, %s38
      %s41 = sadd.s32 1, %s32
      %s42 = scalar_select %p39, %s41, %s32
      %p43 = scmp.ge.s32.totalorder %s42, 2
      %s44 = scalar_select %p43, 0, %s42
      %s45 = ssub.s32 %s32, %s44
      %s46 = ssub.s32 %s33, %s40
      %s47 = sor.u32 %s45, %s46
      %p48 = scmp.eq.s32.totalorder %s47, 0
      %s50 = sadd.s32 %s49, 1
      %s51 = scalar_select %p48, %s49, %s50
      %p54 = pneg %p48
      %p55 = scmp.eq.s32.totalorder %s25, 1
      %p56 = por %p54, %p55
      %p57 = scmp.ne.s32.totalorder %s49, %s52
      %p58 = scmp.eq.s32.totalorder %s25, 0
      %p59 = por %p57, %p58
      %p60 = scmp.ne.s32.totalorder %s49, %s52
      %p61 = scmp.eq.s32.totalorder %s30, 1
      %p62 = por %p60, %p61
      %p63 = scmp.ne.s32.totalorder %s52, %s53
      %p64 = scmp.eq.s32.totalorder %s30, 0
      %p65 = por %p63, %p64
      %p66 = scmp.ne.s32.totalorder %s52, %s53
      %p67 = scmp.eq.s32.totalorder %s31, 1
      %p68 = por %p66, %p67
      %p70 = scmp.ne.s32.totalorder %s53, %s69
      %p71 = scmp.eq.s32.totalorder %s31, 0
      %p72 = por %p70, %p71
      %s73 = ssub.s32 %s32, %s44
      %p74 = scmp.eq.s32.totalorder %s73, 0
      %s76 = sadd.s32 %s75, 1
      %s77 = scalar_select %p74, %s75, %s76
      %p80 = pneg %p74
      %p81 = scmp.eq.s32.totalorder %s25, 1
      %p82 = por %p80, %p81
      %p83 = scmp.ne.s32.totalorder %s75, %s78
      %p84 = scmp.eq.s32.totalorder %s25, 0
      %p85 = por %p83, %p84
      %p86 = scmp.ne.s32.totalorder %s75, %s78
      %p87 = scmp.eq.s32.totalorder %s30, 1
      %p88 = por %p86, %p87
      %p89 = scmp.ne.s32.totalorder %s78, %s79
      %p90 = scmp.eq.s32.totalorder %s30, 0
      %p91 = por %p89, %p90
      %p92 = scmp.ne.s32.totalorder %s78, %s79
      %p93 = scmp.eq.s32.totalorder %s31, 1
      %p94 = por %p92, %p93
      %p96 = scmp.ne.s32.totalorder %s79, %s95
      %p97 = scmp.eq.s32.totalorder %s31, 0
      %p98 = por %p96, %p97
      %s99 = ssub.s32 %s32, %s44
      %p100 = scmp.eq.s32.totalorder %s99, 0
      %s102 = sadd.s32 %s101, 1
      %s103 = scalar_select %p100, %s101, %s102
      %p106 = pneg %p100
      %p107 = scmp.eq.s32.totalorder %s25, 1
      %p108 = por %p106, %p107
      %p109 = scmp.ne.s32.totalorder %s101, %s104
      %p110 = scmp.eq.s32.totalorder %s25, 0
      %p111 = por %p109, %p110
      %p112 = scmp.ne.s32.totalorder %s101, %s104
      %p113 = scmp.eq.s32.totalorder %s30, 1
      %p114 = por %p112, %p113
      %p115 = scmp.ne.s32.totalorder %s104, %s105
      %p116 = scmp.eq.s32.totalorder %s30, 0
      %p117 = por %p115, %p116
      %p118 = scmp.ne.s32.totalorder %s104, %s105
      %p119 = scmp.eq.s32.totalorder %s31, 1
      %p120 = por %p118, %p119
      %p122 = scmp.ne.s32.totalorder %s105, %s121
      %p123 = scmp.eq.s32.totalorder %s31, 0
      %p124 = por %p122, %p123
      %s125 = ssub.s32 %s32, %s44
      %s126 = ssub.s32 %s33, %s40
      %s127 = sor.u32 %s125, %s126
      %p128 = scmp.eq.s32.totalorder %s127, 0
      %s130 = sadd.s32 %s129, 1
      %s131 = scalar_select %p128, %s129, %s130
      %p134 = pneg %p128
      %p135 = scmp.eq.s32.totalorder %s25, 1
      %p136 = por %p134, %p135
      %p137 = scmp.ne.s32.totalorder %s129, %s132
      %p138 = scmp.eq.s32.totalorder %s25, 0
      %p139 = por %p137, %p138
      %p140 = scmp.ne.s32.totalorder %s129, %s132
      %p141 = scmp.eq.s32.totalorder %s30, 1
      %p142 = por %p140, %p141
      %p143 = scmp.ne.s32.totalorder %s132, %s133
      %p144 = scmp.eq.s32.totalorder %s30, 0
      %p145 = por %p143, %p144
      %p146 = scmp.ne.s32.totalorder %s132, %s133
      %p147 = scmp.eq.s32.totalorder %s31, 1
      %p148 = por %p146, %p147
      %p150 = scmp.ne.s32.totalorder %s133, %s149
      %p151 = scmp.eq.s32.totalorder %s31, 0
      %p152 = por %p150, %p151
      %s153 = ssub.s32 %s32, %s44
      %s154 = ssub.s32 %s33, %s40
      %s155 = sor.u32 %s153, %s154
      %p156 = scmp.eq.s32.totalorder %s155, 0
      %s158 = sadd.s32 %s157, 1
      %s159 = scalar_select %p156, %s157, %s158
      %p162 = pneg %p156
      %p163 = scmp.eq.s32.totalorder %s25, 1
      %p164 = por %p162, %p163
      %p165 = scmp.ne.s32.totalorder %s157, %s160
      %p166 = scmp.eq.s32.totalorder %s25, 0
      %p167 = por %p165, %p166
      %p168 = scmp.ne.s32.totalorder %s157, %s160
      %p169 = scmp.eq.s32.totalorder %s30, 1
      %p170 = por %p168, %p169
      %p171 = scmp.ne.s32.totalorder %s160, %s161
      %p172 = scmp.eq.s32.totalorder %s30, 0
      %p173 = por %p171, %p172
      %p174 = scmp.ne.s32.totalorder %s160, %s161
      %p175 = scmp.eq.s32.totalorder %s31, 1
      %p176 = por %p174, %p175
      %p178 = scmp.ne.s32.totalorder %s161, %s177
      %p179 = scmp.eq.s32.totalorder %s31, 0
      %p180 = por %p178, %p179
      %s181 = ssub.s32 %s32, %s44
      %s182 = ssub.s32 %s33, %s40
      %s183 = sor.u32 %s181, %s182
      %p184 = scmp.eq.s32.totalorder %s183, 0
      %s186 = sadd.s32 %s185, 1
      %s187 = scalar_select %p184, %s185, %s186
      %p190 = pneg %p184
      %p191 = scmp.eq.s32.totalorder %s25, 1
      %p192 = por %p190, %p191
      %p193 = scmp.ne.s32.totalorder %s185, %s188
      %p194 = scmp.eq.s32.totalorder %s25, 0
      %p195 = por %p193, %p194
      %p196 = scmp.ne.s32.totalorder %s185, %s188
      %p197 = scmp.eq.s32.totalorder %s30, 1
      %p198 = por %p196, %p197
      %p199 = scmp.ne.s32.totalorder %s188, %s189
      %p200 = scmp.eq.s32.totalorder %s30, 0
      %p201 = por %p199, %p200
      %p202 = scmp.ne.s32.totalorder %s188, %s189
      %p203 = scmp.eq.s32.totalorder %s31, 1
      %p204 = por %p202, %p203
      %p206 = scmp.ne.s32.totalorder %s189, %s205
      %p207 = scmp.eq.s32.totalorder %s31, 0
      %p208 = por %p206, %p207
      %p209 = scmp.le.s32.totalorder 1, %s25
      %p210 = scmp.lt.s32.totalorder %s25, 3
      %p211 = pnand %p209, %p210
      %p212 = pneg %p211
      // Predicated region
      $region9: #{tpu_custom_call.1} parent=5 // pred_check
        _
      $region10: #{tpu_custom_call.1} parent=5 // pred_check_branch
        %214 = sbr.rel (%p211) target = $region12
      $region11: #{tpu_custom_call.1} parent=5 // pred_region
        %s215 = ssub.s32 %s25, 1
        // Predicated region
        $region13: #{tpu_custom_call.1} parent=11 // pred_check
          %p216 = pneg %p91
        $region14: #{tpu_custom_call.1} parent=11 // pred_check_branch
          %218 = sbr.rel (%p216) target = $region16
        $region15: #{tpu_custom_call.1} parent=11 // pred_region
          %220 = vsyncadd [#allocation6], 0
          %s221 = smul.addr %s34, 8
          %s222 = scalar_lea.hbm %s1, %s221
          %s224 = sshll.u32 %s222, 4
          %s225 = int_to_ptr.hbm [resolvable:$true] %s224
          %s226 = sshll.u32 [#allocation5], 4
          %s227 = int_to_ptr.vmem [resolvable:$true] %s226
          %229 = dma.hbm_to_vmem [thread:$0]  %s225, 128, %s227, [#allocation6]
        $region16: #{tpu_custom_call.1} parent=11 // pred_fallthru
          _
        // Predicated region
        $region17: #{tpu_custom_call.1} parent=11 // pred_check
          %p230 = pneg %p117
        $region18: #{tpu_custom_call.1} parent=11 // pred_check_branch
          %232 = sbr.rel (%p230) target = $region20
        $region19: #{tpu_custom_call.1} parent=11 // pred_region
          %234 = vsyncadd [#allocation6], 0
          %s235 = smul.addr %s34, 8
          %s236 = scalar_lea.hbm %s2, %s235
          %s238 = sshll.u32 %s236, 4
          %s239 = int_to_ptr.hbm [resolvable:$true] %s238
          %s240 = sshll.u32 [#allocation7], 4
          %s241 = int_to_ptr.vmem [resolvable:$true] %s240
          %243 = dma.hbm_to_vmem [thread:$0]  %s239, 128, %s241, [#allocation6]
        $region20: #{tpu_custom_call.1} parent=11 // pred_fallthru
          _
      $region12: #{tpu_custom_call.1} parent=5 // pred_fallthru
        _
      %p244 = scmp.lt.s32.totalorder %s25, 2
      // Predicated region
      $region21: #{tpu_custom_call.1} parent=5 // pred_check
        %p245 = pneg %p244
      $region22: #{tpu_custom_call.1} parent=5 // pred_check_branch
        %247 = sbr.rel (%p245) target = $region24
      $region23: #{tpu_custom_call.1} parent=5 // pred_region
        // Predicated region
        $region25: #{tpu_custom_call.1} parent=23 // pred_check
          %p248 = pneg %p59
        $region26: #{tpu_custom_call.1} parent=23 // pred_check_branch
          %250 = sbr.rel (%p248) target = $region28
        $region27: #{tpu_custom_call.1} parent=23 // pred_region
          %s251 = sand.u32 %s49, 1
          %s252 = scalar_lea.sflag [#allocation3], %s251
          %s253 = sand.u32 %s49, 1
          %s254 = smul.addr %s253, 8
          %s255 = scalar_lea.vmem [#allocation2], %s254
          %257 = vsyncadd %s252, 0
          %s258 = sadd.s32 %s33, %s32
          %s259 = smul.addr %s258, 8
          %s260 = scalar_lea.hbm %s0, %s259
          %s262 = sshll.u32 %s260, 4
          %s263 = int_to_ptr.hbm [resolvable:$true] %s262
          %s264 = sshll.u32 %s255, 4
          %s265 = int_to_ptr.vmem [resolvable:$true] %s264
          %267 = dma.hbm_to_vmem [thread:$0]  %s263, 128, %s265, %s252
        $region28: #{tpu_custom_call.1} parent=23 // pred_fallthru
          _
        // Predicated region
        $region29: #{tpu_custom_call.1} parent=23 // pred_check
          %p268 = pneg %p139
        $region30: #{tpu_custom_call.1} parent=23 // pred_check_branch
          %270 = sbr.rel (%p268) target = $region32
        $region31: #{tpu_custom_call.1} parent=23 // pred_region
          %s271 = sand.u32 %s129, 1
          %s272 = scalar_lea.sflag [#allocation9], %s271
          %s273 = sand.u32 %s129, 1
          %s274 = smul.addr %s273, 2
          %s275 = scalar_lea.vmem [#allocation8], %s274
          %277 = vsyncadd %s272, 0
          %s278 = sadd.s32 %s33, %s32
          %s279 = smul.addr %s278, 2
          %s280 = scalar_lea.hbm %s3, %s279
          %s282 = sshll.u32 %s280, 4
          %s283 = int_to_ptr.hbm [resolvable:$true] %s282
          %s284 = sshll.u32 %s275, 4
          %s285 = int_to_ptr.vmem [resolvable:$true] %s284
          %287 = dma.hbm_to_vmem [thread:$0]  %s283, 32, %s285, %s272
        $region32: #{tpu_custom_call.1} parent=23 // pred_fallthru
          _
      $region24: #{tpu_custom_call.1} parent=5 // pred_fallthru
        _
      %p288 = scmp.le.s32.totalorder 1, %s25
      %p289 = scmp.lt.s32.totalorder %s25, 3
      %p290 = pnand %p288, %p289
      %p291 = pneg %p290
      // Predicated region
      $region33: #{tpu_custom_call.1} parent=5 // pred_check
        _
      $region34: #{tpu_custom_call.1} parent=5 // pred_check_branch
        %293 = sbr.rel (%p290) target = $region36
      $region35: #{tpu_custom_call.1} parent=5 // pred_region
        %s294 = ssub.s32 %s25, 1
        %s295 = sand.u32 %s52, 1
        %s296 = scalar_lea.sflag [#allocation3], %s295
        %s297 = sand.u32 %s52, 1
        %s298 = smul.addr %s297, 8
        %s299 = scalar_lea.vmem [#allocation2], %s298
        // Predicated region
        $region37: #{tpu_custom_call.1} parent=35 // pred_check
          %p300 = pneg %p65
        $region38: #{tpu_custom_call.1} parent=35 // pred_check_branch
          %302 = sbr.rel (%p300) target = $region40
        $region39: #{tpu_custom_call.1} parent=35 // pred_region
          %304 = dma.done %s296, 128
        $region40: #{tpu_custom_call.1} parent=35 // pred_fallthru
          _
        // Predicated region
        $region41: #{tpu_custom_call.1} parent=35 // pred_check
          %p305 = pneg %p91
        $region42: #{tpu_custom_call.1} parent=35 // pred_check_branch
          %307 = sbr.rel (%p305) target = $region44
        $region43: #{tpu_custom_call.1} parent=35 // pred_region
          %309 = dma.done [#allocation6], 128
        $region44: #{tpu_custom_call.1} parent=35 // pred_fallthru
          _
        // Predicated region
        $region45: #{tpu_custom_call.1} parent=35 // pred_check
          %p310 = pneg %p117
        $region46: #{tpu_custom_call.1} parent=35 // pred_check_branch
          %312 = sbr.rel (%p310) target = $region48
        $region47: #{tpu_custom_call.1} parent=35 // pred_region
          %314 = dma.done [#allocation6], 128
        $region48: #{tpu_custom_call.1} parent=35 // pred_fallthru
          _
        %s315 = sand.u32 %s132, 1
        %s316 = scalar_lea.sflag [#allocation9], %s315
        %s317 = sand.u32 %s132, 1
        %s318 = smul.addr %s317, 2
        %s319 = scalar_lea.vmem [#allocation8], %s318
        // Predicated region
        $region49: #{tpu_custom_call.1} parent=35 // pred_check
          %p320 = pneg %p145
        $region50: #{tpu_custom_call.1} parent=35 // pred_check_branch
          %322 = sbr.rel (%p320) target = $region52
        $region51: #{tpu_custom_call.1} parent=35 // pred_region
          %324 = dma.done %s316, 32
        $region52: #{tpu_custom_call.1} parent=35 // pred_fallthru
          _
        %s325 = sand.u32 %s52, 1
        %s326 = scalar_lea.sflag [#allocation3], %s325
        %s327 = sand.u32 %s52, 1
        %s328 = smul.addr %s327, 8
        %s329 = scalar_lea.vmem [#allocation2], %s328
        %p330 = pneg %p65
        %p331 = pneg %p62
        %p332 = pneg %p91
        %p333 = pneg %p88
        %p334 = pneg %p117
        %p335 = pneg %p114
        %s336 = sand.u32 %s132, 1
        %s337 = scalar_lea.sflag [#allocation9], %s336
        %s338 = sand.u32 %s132, 1
        %s339 = smul.addr %s338, 2
        %s340 = scalar_lea.vmem [#allocation8], %s339
        %p341 = pneg %p145
        %p342 = pneg %p142
        %p343 = pneg %p173
        %p344 = pneg %p170
        %s345 = sand.u32 %s160, 1
        %s346 = scalar_lea.sflag [#allocation4], %s345
        %s347 = sand.u32 %s160, 1
        %s348 = smul.addr %s347, 8
        %s349 = scalar_lea.vmem [#allocation10], %s348
        %p350 = pneg %p201
        %p351 = pneg %p198
        %s352 = sand.u32 %s188, 1
        %s353 = scalar_lea.sflag [#allocation12], %s352
        %s354 = sand.u32 %s188, 1
        %s355 = smul.addr %s354, 4
        %s356 = scalar_lea.vmem [#allocation11], %s355
        %v359 = vld [vmem:[%s299] sm:$0xff]
        %v360 = vmul.f32 %v359, 0.17677669
        %v361 = vld [vmem:[#allocation5] sm:$0xff]
        %v362 = vld [vmem:[#allocation7] sm:$0xff]
        %vm363 = vcmask 261120
        %v365 = vsel %vm363, %v360, 0
        %v368 = vsel %vm363, %v361, 0
        %370 = vmatpush.xpose.msra.mxu0 0.0
        %371 = vmatpush.xpose.msra.mxu0 0.0
        %372 = vmatpush.xpose.msra.mxu0 0.0
        %373 = vmatpush.xpose.msra.mxu0 0.0
        %374 = vmatpush.xpose.msra.mxu0 0.0
        %375 = vmatpush.xpose.msra.mxu0 0.0
        %376 = vmatpush.xpose.msra.mxu0 0.0
        %377 = vmatpush.xpose.msra.mxu0 0.0
        %378 = vmatpush.xpose.msra.mxu0 0.0
        %379 = vmatpush.xpose.msra.mxu0 0.0
        %380 = vmatpush.xpose.msra.mxu0 0.0
        %381 = vmatpush.xpose.msra.mxu0 0.0
        %382 = vmatpush.xpose.msra.mxu0 0.0
        %383 = vmatpush.xpose.msra.mxu0 0.0
        %384 = vmatpush.xpose.msra.mxu0 0.0
        %385 = vmatpush.xpose.msra.mxu0 %v368
        %386 = vmatmul.f32.gmra.mxu0 %v365
        %v387 = vpop.f32.mrf.mxu0
        %v388 = vadd.f32 0.0, %v387
        %389 = vdwg.mxu0
        %v390 = vld [vmem:[%s319] sm:$0x3]
        %vm391 = vnez %v390
        %v392 = vsel %vm391, 16843009, 0
        %v393 = vunpack.c.0.s8 %v392
        %vm394 = vcmp.ne.s32.totalorder %v393, 0
        %v395 = vsel %vm394, -1e+30, %v388
        %vm396 = vcmask 64512
        %v397 = vsel %vm396, %v395, -inf
        %398 = vmax.xlane.f32.xlu0 %v397
        %v399 = vpop.xlane.xlu0 %398
        %v400 = vsub.f32 %v395, %v399
        %v401 = vmul.f32 %v400, 1.442695
        %v402 = vpow.pop %v401
        %v403 = vsel %vm396, %v402, 0.0
        %404 = vadd.xlane.f32.xlu0 %v403
        %v405 = vpop.xlane.xlu0 %404
        %v406 = vrcp.pop %v405
        %v407 = vmul.f32 %v405, %v406
        %v408 = vsub.f32 1.0, %v407
        %v409 = vmul.f32 %v406, %v408
        %v410 = vadd.f32 %v406, %v409
        %vm411 = vweird.f32 %v405
        %vm412 = vweird.f32 %v406
        %vm413 = vmor %vm411, %vm412
        %v414 = vsel %vm413, %v406, %v410
        %v415 = vand.u32 2147483647, %v405
        %vm416 = vcmp.eq.f32.partialorder %v415, 8.507059e+37
        %v417 = vand.u32 %v405, 2147483648
        %v418 = vor.u32 1.1754944e-38, %v417
        %v419 = vsel %vm416, %v418, %v414
        %v420 = vmul.f32 %v402, %v419
        %v422 = vsel %vm396, %v420, 0
        %424 = vmatpush.msra.mxu0 0.0
        %425 = vmatpush.msra.mxu0 0.0
        %426 = vmatpush.msra.mxu0 0.0
        %427 = vmatpush.msra.mxu0 0.0
        %428 = vmatpush.msra.mxu0 0.0
        %429 = vmatpush.msra.mxu0 0.0
        %430 = vmatpush.msra.mxu0 0.0
        %431 = vmatpush.msra.mxu0 0.0
        %432 = vmatpush.msra.mxu0 0.0
        %433 = vmatpush.msra.mxu0 0.0
        %434 = vmatpush.msra.mxu0 0.0
        %435 = vmatpush.msra.mxu0 0.0
        %436 = vmatpush.msra.mxu0 0.0
        %437 = vmatpush.msra.mxu0 0.0
        %438 = vmatpush.msra.mxu0 0.0
        %439 = vmatpush.msra.mxu0 %v362
        %440 = vmatmul.f32.gmra.mxu0 %v422
        %v441 = vpop.f32.mrf.mxu0
        %v442 = vadd.f32 0.0, %v441
        %443 = vdwg.mxu0
        %v444 = vpack.c.bf16 %v420, %v420
        %vm445 = vcmask 60416
        %446 = vst.msk [vmem:[%s356] sm:$0xf] %vm445, %v444
        %447 = vst.msk [vmem:[%s349] sm:$0xff] %vm363, %v442
        %s448 = sand.u32 %s160, 1
        %s449 = scalar_lea.sflag [#allocation4], %s448
        %s450 = sand.u32 %s160, 1
        %s451 = smul.addr %s450, 8
        %s452 = scalar_lea.vmem [#allocation10], %s451
        %s453 = sand.u32 %s188, 1
        %s454 = scalar_lea.sflag [#allocation12], %s453
        %s455 = sand.u32 %s188, 1
        %s456 = smul.addr %s455, 4
        %s457 = scalar_lea.vmem [#allocation11], %s456
        // Predicated region
        $region53: #{tpu_custom_call.1} parent=35 // pred_check
          %p458 = pneg %p170
        $region54: #{tpu_custom_call.1} parent=35 // pred_check_branch
          %460 = sbr.rel (%p458) target = $region56
        $region55: #{tpu_custom_call.1} parent=35 // pred_region
          %462 = vsyncadd %s449, 0
          %s463 = sadd.s32 %s35, %s34
          %s464 = smul.addr %s463, 8
          %s465 = scalar_lea.hbm %s4, %s464
          %s467 = sshll.u32 %s452, 4
          %s468 = int_to_ptr.vmem [resolvable:$true] %s467
          %s469 = sshll.u32 %s465, 4
          %s470 = int_to_ptr.hbm [resolvable:$true] %s469
          %472 = dma.vmem_to_hbm [thread:$0]  %s468, 128, %s470, %s449
        $region56: #{tpu_custom_call.1} parent=35 // pred_fallthru
          _
        // Predicated region
        $region57: #{tpu_custom_call.1} parent=35 // pred_check
          %p473 = pneg %p198
        $region58: #{tpu_custom_call.1} parent=35 // pred_check_branch
          %475 = sbr.rel (%p473) target = $region60
        $region59: #{tpu_custom_call.1} parent=35 // pred_region
          %477 = vsyncadd %s454, 0
          %s478 = sadd.s32 %s35, %s34
          %s479 = smul.addr %s478, 4
          %s480 = scalar_lea.hbm %s5, %s479
          %s482 = sshll.u32 %s457, 4
          %s483 = int_to_ptr.vmem [resolvable:$true] %s482
          %s484 = sshll.u32 %s480, 4
          %s485 = int_to_ptr.hbm [resolvable:$true] %s484
          %487 = dma.vmem_to_hbm [thread:$0]  %s483, 64, %s485, %s454
        $region60: #{tpu_custom_call.1} parent=35 // pred_fallthru
          _
      $region36: #{tpu_custom_call.1} parent=5 // pred_fallthru
        _
      %p488 = scmp.le.s32.totalorder 2, %s25
      // Predicated region
      $region61: #{tpu_custom_call.1} parent=5 // pred_check
        %p489 = pneg %p488
      $region62: #{tpu_custom_call.1} parent=5 // pred_check_branch
        %491 = sbr.rel (%p489) target = $region64
      $region63: #{tpu_custom_call.1} parent=5 // pred_region
        %s492 = ssub.s32 %s25, 2
        // Predicated region
        $region65: #{tpu_custom_call.1} parent=63 // pred_check
          %p493 = pneg %p176
        $region66: #{tpu_custom_call.1} parent=63 // pred_check_branch
          %495 = sbr.rel (%p493) target = $region68
        $region67: #{tpu_custom_call.1} parent=63 // pred_region
          %s496 = sand.u32 %s161, 1
          %s497 = scalar_lea.sflag [#allocation4], %s496
          %s498 = sand.u32 %s161, 1
          %s499 = smul.addr %s498, 8
          %s500 = scalar_lea.vmem [#allocation10], %s499
          %502 = dma.done %s497, 128
        $region68: #{tpu_custom_call.1} parent=63 // pred_fallthru
          _
        // Predicated region
        $region69: #{tpu_custom_call.1} parent=63 // pred_check
          %p503 = pneg %p204
        $region70: #{tpu_custom_call.1} parent=63 // pred_check_branch
          %505 = sbr.rel (%p503) target = $region72
        $region71: #{tpu_custom_call.1} parent=63 // pred_region
          %s506 = sand.u32 %s189, 1
          %s507 = scalar_lea.sflag [#allocation12], %s506
          %s508 = sand.u32 %s189, 1
          %s509 = smul.addr %s508, 4
          %s510 = scalar_lea.vmem [#allocation11], %s509
          %512 = dma.done %s507, 64
        $region72: #{tpu_custom_call.1} parent=63 // pred_fallthru
          _
      $region64: #{tpu_custom_call.1} parent=5 // pred_fallthru
        _
    $region6: #{tpu_custom_call.1} parent=1 // loop_footer
      %s29 = sadd.s32 1, %s25
    $region7: #{tpu_custom_call.1} parent=1 // loop_footer_branch
      %24 = sbr.rel target = $region3
    $region8: #{tpu_custom_call.1} parent=1 // loop_exit
      _
    %513 = vsyncpa [#allocation3], 1
    %s514 = scalar_lea.sflag [#allocation3], 1
    %515 = vsyncpa %s514, 1
    %516 = vsyncpa [#allocation6], 1
    %517 = vsyncpa [#allocation9], 1
    %s518 = scalar_lea.sflag [#allocation9], 1
    %519 = vsyncpa %s518, 1
    %520 = vsyncpa [#allocation4], 1
    %s521 = scalar_lea.sflag [#allocation4], 1
    %522 = vsyncpa %s521, 1
    %523 = vsyncpa [#allocation12], 1
    %s524 = scalar_lea.sflag [#allocation12], 1
    %525 = vsyncpa %s524, 1

// kernel: tpu_custom_call.1
$region0: #{tpu_custom_call.1}
  #allocation0 [shape = 'u32[]', space=smem, size = 0x4, offset = 0x4, fixed_abs, tag = 'smem constant byte address 0x4 - core index']
  #allocation1 [shape = 'u32[72,128]{1,0:T(1,128)}', space=vmem, size = 0x9000, scoped, tag = 'internal scratch']
  %s0 = inlined_call_operand.hbm [shape: f32[2,8,32], index: 0, kind: input, shape index: {}]
  %s1 = inlined_call_operand.hbm [shape: f32[2,8,32], index: 1, kind: input, shape index: {}]
  %s2 = inlined_call_operand.hbm [shape: f32[2,8,32], index: 2, kind: input, shape index: {}]
  %s3 = inlined_call_operand.hbm [shape: s8[2,8,8], index: 3, kind: input, shape index: {}]
  %s4 = inlined_call_operand.hbm [shape: f32[2,8,32], index: 4, kind: output, shape index: {0}]
  %s5 = inlined_call_operand.hbm [shape: bf16[2,8,8], index: 5, kind: output, shape index: {1}]
  %6 = xla_tuple %s4, %s5
  %s7 = sld [smem:[#allocation0]]
  $region73: #{tpu_custom_call.1} parent=0
    _
  %s9 = ssub.s32 1, %s7
  %s10 = scalar_select 0, %s9, %s7
  $region1: #{tpu_custom_call.1} parent=0
    #allocation2 [shape = 'u8[8192]{0}', space=vmem, size = 0x2000, scoped, tag = 'input window, operand 0']
    #allocation3 [shape = 's32[2]{0}', space=sflag, size = 0x8, scoped, tag = 'scoped memory for tpu_custom_call.1']
    #allocation4 [shape = 's32[2]{0}', space=sflag, size = 0x8, scoped, tag = 'scoped memory for tpu_custom_call.1']
    #allocation5 [shape = 'u8[8192]{0}', space=vmem, size = 0x2000, scoped, tag = 'input window, operand 1']
    #allocation6 [shape = 's32[2]{0}', space=sflag, size = 0x8, scoped, tag = 'scoped memory for tpu_custom_call.1']
    #allocation7 [shape = 'u8[8192]{0}', space=vmem, size = 0x2000, scoped, tag = 'input window, operand 2']
    #allocation8 [shape = 'u8[2048]{0}', space=vmem, size = 0x800, scoped, tag = 'input window, operand 3']
    #allocation9 [shape = 's32[2]{0}', space=sflag, size = 0x8, scoped, tag = 'scoped memory for tpu_custom_call.1']
    #allocation10 [shape = 'u8[8192]{0}', space=vmem, size = 0x2000, scoped, tag = 'output window, operand 0']
    #allocation11 [shape = 'u8[4096]{0}', space=vmem, size = 0x1000, scoped, tag = 'output window, operand 1']
    #allocation12 [shape = 's32[2]{0}', space=sflag, size = 0x8, scoped, tag = 'scoped memory for tpu_custom_call.1']
    %11 = vsyncpa [#allocation3], 0
    %s12 = scalar_lea.sflag [#allocation3], 1
    %13 = vsyncpa %s12, 0
    %14 = vsyncpa [#allocation6], 0
    %s15 = scalar_lea.sflag [#allocation6], 1
    %16 = vsyncpa %s15, 0
    %17 = vsyncpa [#allocation9], 0
    %s18 = scalar_lea.sflag [#allocation9], 1
    %19 = vsyncpa %s18, 0
    %20 = vsyncpa [#allocation4], 0
    %s21 = scalar_lea.sflag [#allocation4], 1
    %22 = vsyncpa %s21, 0
    %23 = vsyncpa [#allocation12], 0
    %s24 = scalar_lea.sflag [#allocation12], 1
    %25 = vsyncpa %s24, 0
    loop: start=0, step=1, limit=4
    $region2: #{tpu_custom_call.1} parent=1 // loop_pre_header
      _
    $region3: #{tpu_custom_call.1} parent=1 // loop_header
      %s27 = sphi 0, %s31
      %p28 = scmp.ge.s32.totalorder %s27, 4
      %s34 = sphi 0, %s46
      %s35 = sphi 0, %s42
      %s36 = sphi 0, %s34
      %s37 = sphi 0, %s35
      %s38 = sphi 0, %s36
      %s39 = sphi 0, %s37
      %s51 = sphi 0, %s53
      %s54 = sphi 0, %s51
      %s55 = sphi 0, %s54
      %s71 = sphi 0, %s55
      %s77 = sphi 0, %s79
      %s80 = sphi 0, %s77
      %s81 = sphi 0, %s80
      %s97 = sphi 0, %s81
      %s103 = sphi 0, %s105
      %s106 = sphi 0, %s103
      %s107 = sphi 0, %s106
      %s123 = sphi 0, %s107
      %s131 = sphi 0, %s133
      %s134 = sphi 0, %s131
      %s135 = sphi 0, %s134
      %s151 = sphi 0, %s135
      %s159 = sphi 0, %s161
      %s162 = sphi 0, %s159
      %s163 = sphi 0, %s162
      %s179 = sphi 0, %s163
      %s187 = sphi 0, %s189
      %s190 = sphi 0, %s187
      %s191 = sphi 0, %s190
      %s207 = sphi 0, %s191
    $region4: #{tpu_custom_call.1} parent=1 // loop_header_branch
      %30 = sbr.rel (%p28) target = $region8
    $region5: #{tpu_custom_call.1} parent=1 // loop_body
      %s32 = ssub.s32 %s27, 1
      %s33 = ssub.s32 %s27, 2
      %s40 = sadd.s32 1, %s35
      %p41 = scmp.ge.s32.totalorder %s40, 1
      %s42 = scalar_select %p41, 0, %s40
      %s43 = sadd.s32 1, %s34
      %s44 = scalar_select %p41, %s43, %s34
      %p45 = scmp.ge.s32.totalorder %s44, 2
      %s46 = scalar_select %p45, 0, %s44
      %s47 = ssub.s32 %s34, %s46
      %s48 = ssub.s32 %s35, %s42
      %s49 = sor.u32 %s47, %s48
      %p50 = scmp.eq.s32.totalorder %s49, 0
      %s52 = sadd.s32 %s51, 1
      %s53 = scalar_select %p50, %s51, %s52
      %p56 = pneg %p50
      %p57 = scmp.eq.s32.totalorder %s27, 1
      %p58 = por %p56, %p57
      %p59 = scmp.ne.s32.totalorder %s51, %s54
      %p60 = scmp.eq.s32.totalorder %s27, 0
      %p61 = por %p59, %p60
      %p62 = scmp.ne.s32.totalorder %s51, %s54
      %p63 = scmp.eq.s32.totalorder %s32, 1
      %p64 = por %p62, %p63
      %p65 = scmp.ne.s32.totalorder %s54, %s55
      %p66 = scmp.eq.s32.totalorder %s32, 0
      %p67 = por %p65, %p66
      %p68 = scmp.ne.s32.totalorder %s54, %s55
      %p69 = scmp.eq.s32.totalorder %s33, 1
      %p70 = por %p68, %p69
      %p72 = scmp.ne.s32.totalorder %s55, %s71
      %p73 = scmp.eq.s32.totalorder %s33, 0
      %p74 = por %p72, %p73
      %s75 = ssub.s32 %s34, %s46
      %p76 = scmp.eq.s32.totalorder %s75, 0
      %s78 = sadd.s32 %s77, 1
      %s79 = scalar_select %p76, %s77, %s78
      %p82 = pneg %p76
      %p83 = scmp.eq.s32.totalorder %s27, 1
      %p84 = por %p82, %p83
      %p85 = scmp.ne.s32.totalorder %s77, %s80
      %p86 = scmp.eq.s32.totalorder %s27, 0
      %p87 = por %p85, %p86
      %p88 = scmp.ne.s32.totalorder %s77, %s80
      %p89 = scmp.eq.s32.totalorder %s32, 1
      %p90 = por %p88, %p89
      %p91 = scmp.ne.s32.totalorder %s80, %s81
      %p92 = scmp.eq.s32.totalorder %s32, 0
      %p93 = por %p91, %p92
      %p94 = scmp.ne.s32.totalorder %s80, %s81
      %p95 = scmp.eq.s32.totalorder %s33, 1
      %p96 = por %p94, %p95
      %p98 = scmp.ne.s32.totalorder %s81, %s97
      %p99 = scmp.eq.s32.totalorder %s33, 0
      %p100 = por %p98, %p99
      %s101 = ssub.s32 %s34, %s46
      %p102 = scmp.eq.s32.totalorder %s101, 0
      %s104 = sadd.s32 %s103, 1
      %s105 = scalar_select %p102, %s103, %s104
      %p108 = pneg %p102
      %p109 = scmp.eq.s32.totalorder %s27, 1
      %p110 = por %p108, %p109
      %p111 = scmp.ne.s32.totalorder %s103, %s106
      %p112 = scmp.eq.s32.totalorder %s27, 0
      %p113 = por %p111, %p112
      %p114 = scmp.ne.s32.totalorder %s103, %s106
      %p115 = scmp.eq.s32.totalorder %s32, 1
      %p116 = por %p114, %p115
      %p117 = scmp.ne.s32.totalorder %s106, %s107
      %p118 = scmp.eq.s32.totalorder %s32, 0
      %p119 = por %p117, %p118
      %p120 = scmp.ne.s32.totalorder %s106, %s107
      %p121 = scmp.eq.s32.totalorder %s33, 1
      %p122 = por %p120, %p121
      %p124 = scmp.ne.s32.totalorder %s107, %s123
      %p125 = scmp.eq.s32.totalorder %s33, 0
      %p126 = por %p124, %p125
      %s127 = ssub.s32 %s34, %s46
      %s128 = ssub.s32 %s35, %s42
      %s129 = sor.u32 %s127, %s128
      %p130 = scmp.eq.s32.totalorder %s129, 0
      %s132 = sadd.s32 %s131, 1
      %s133 = scalar_select %p130, %s131, %s132
      %p136 = pneg %p130
      %p137 = scmp.eq.s32.totalorder %s27, 1
      %p138 = por %p136, %p137
      %p139 = scmp.ne.s32.totalorder %s131, %s134
      %p140 = scmp.eq.s32.totalorder %s27, 0
      %p141 = por %p139, %p140
      %p142 = scmp.ne.s32.totalorder %s131, %s134
      %p143 = scmp.eq.s32.totalorder %s32, 1
      %p144 = por %p142, %p143
      %p145 = scmp.ne.s32.totalorder %s134, %s135
      %p146 = scmp.eq.s32.totalorder %s32, 0
      %p147 = por %p145, %p146
      %p148 = scmp.ne.s32.totalorder %s134, %s135
      %p149 = scmp.eq.s32.totalorder %s33, 1
      %p150 = por %p148, %p149
      %p152 = scmp.ne.s32.totalorder %s135, %s151
      %p153 = scmp.eq.s32.totalorder %s33, 0
      %p154 = por %p152, %p153
      %s155 = ssub.s32 %s34, %s46
      %s156 = ssub.s32 %s35, %s42
      %s157 = sor.u32 %s155, %s156
      %p158 = scmp.eq.s32.totalorder %s157, 0
      %s160 = sadd.s32 %s159, 1
      %s161 = scalar_select %p158, %s159, %s160
      %p164 = pneg %p158
      %p165 = scmp.eq.s32.totalorder %s27, 1
      %p166 = por %p164, %p165
      %p167 = scmp.ne.s32.totalorder %s159, %s162
      %p168 = scmp.eq.s32.totalorder %s27, 0
      %p169 = por %p167, %p168
      %p170 = scmp.ne.s32.totalorder %s159, %s162
      %p171 = scmp.eq.s32.totalorder %s32, 1
      %p172 = por %p170, %p171
      %p173 = scmp.ne.s32.totalorder %s162, %s163
      %p174 = scmp.eq.s32.totalorder %s32, 0
      %p175 = por %p173, %p174
      %p176 = scmp.ne.s32.totalorder %s162, %s163
      %p177 = scmp.eq.s32.totalorder %s33, 1
      %p178 = por %p176, %p177
      %p180 = scmp.ne.s32.totalorder %s163, %s179
      %p181 = scmp.eq.s32.totalorder %s33, 0
      %p182 = por %p180, %p181
      %s183 = ssub.s32 %s34, %s46
      %s184 = ssub.s32 %s35, %s42
      %s185 = sor.u32 %s183, %s184
      %p186 = scmp.eq.s32.totalorder %s185, 0
      %s188 = sadd.s32 %s187, 1
      %s189 = scalar_select %p186, %s187, %s188
      %p192 = pneg %p186
      %p193 = scmp.eq.s32.totalorder %s27, 1
      %p194 = por %p192, %p193
      %p195 = scmp.ne.s32.totalorder %s187, %s190
      %p196 = scmp.eq.s32.totalorder %s27, 0
      %p197 = por %p195, %p196
      %p198 = scmp.ne.s32.totalorder %s187, %s190
      %p199 = scmp.eq.s32.totalorder %s32, 1
      %p200 = por %p198, %p199
      %p201 = scmp.ne.s32.totalorder %s190, %s191
      %p202 = scmp.eq.s32.totalorder %s32, 0
      %p203 = por %p201, %p202
      %p204 = scmp.ne.s32.totalorder %s190, %s191
      %p205 = scmp.eq.s32.totalorder %s33, 1
      %p206 = por %p204, %p205
      %p208 = scmp.ne.s32.totalorder %s191, %s207
      %p209 = scmp.eq.s32.totalorder %s33, 0
      %p210 = por %p208, %p209
      %p211 = scmp.le.s32.totalorder 1, %s27
      %p212 = scmp.lt.s32.totalorder %s27, 3
      %p213 = pnand %p211, %p212
      %p214 = pneg %p213
      // Predicated region
      $region9: #{tpu_custom_call.1} parent=5 // pred_check
        _
      $region10: #{tpu_custom_call.1} parent=5 // pred_check_branch
        %216 = sbr.rel (%p213) target = $region12
      $region11: #{tpu_custom_call.1} parent=5 // pred_region
        %s217 = ssub.s32 %s27, 1
      $region12: #{tpu_custom_call.1} parent=5 // pred_fallthru
        _
      %p218 = scmp.lt.s32.totalorder %s27, 2
      // Predicated region
      $region13: #{tpu_custom_call.1} parent=5 // pred_check
        %p219 = pneg %p218
      $region14: #{tpu_custom_call.1} parent=5 // pred_check_branch
        %221 = sbr.rel (%p219) target = $region16
      $region15: #{tpu_custom_call.1} parent=5 // pred_region
        // Predicated region
        $region17: #{tpu_custom_call.1} parent=15 // pred_check
          %p222 = pneg %p61
        $region18: #{tpu_custom_call.1} parent=15 // pred_check_branch
          %224 = sbr.rel (%p222) target = $region20
        $region19: #{tpu_custom_call.1} parent=15 // pred_region
          %s225 = sand.u32 %s51, 1
          %s226 = scalar_lea.sflag [#allocation3], %s225
          %s227 = sand.u32 %s51, 1
          %s228 = smul.addr %s227, 8
          %s229 = scalar_lea.vmem [#allocation2], %s228
          %231 = vsyncadd %s226, 0
          %s232 = sadd.s32 %s35, %s34
          %s233 = smul.addr %s232, 8
          %s234 = scalar_lea.hbm %s0, %s233
          %s236 = sshll.u32 %s234, 4
          %s237 = int_to_ptr.hbm [resolvable:$true] %s236
          %s238 = sshll.u32 %s229, 4
          %s239 = int_to_ptr.vmem [resolvable:$true] %s238
          %241 = dma.hbm_to_vmem [thread:$0]  %s237, 128, %s239, %s226
        $region20: #{tpu_custom_call.1} parent=15 // pred_fallthru
          _
        // Predicated region
        $region21: #{tpu_custom_call.1} parent=15 // pred_check
          %p242 = pneg %p87
        $region22: #{tpu_custom_call.1} parent=15 // pred_check_branch
          %244 = sbr.rel (%p242) target = $region24
        $region23: #{tpu_custom_call.1} parent=15 // pred_region
          %s245 = sand.u32 %s27, 1
          %s246 = scalar_lea.sflag [#allocation6], %s245
          %s247 = sand.u32 %s77, 1
          %s248 = smul.addr %s247, 8
          %s249 = scalar_lea.vmem [#allocation5], %s248
          %251 = vsyncadd %s246, 0
          %s252 = smul.addr %s34, 8
          %s253 = scalar_lea.hbm %s1, %s252
          %s255 = sshll.u32 %s253, 4
          %s256 = int_to_ptr.hbm [resolvable:$true] %s255
          %s257 = sshll.u32 %s249, 4
          %s258 = int_to_ptr.vmem [resolvable:$true] %s257
          %260 = dma.hbm_to_vmem [thread:$0]  %s256, 128, %s258, %s246
        $region24: #{tpu_custom_call.1} parent=15 // pred_fallthru
          _
        // Predicated region
        $region25: #{tpu_custom_call.1} parent=15 // pred_check
          %p261 = pneg %p113
        $region26: #{tpu_custom_call.1} parent=15 // pred_check_branch
          %263 = sbr.rel (%p261) target = $region28
        $region27: #{tpu_custom_call.1} parent=15 // pred_region
          %s264 = sand.u32 %s27, 1
          %s265 = scalar_lea.sflag [#allocation6], %s264
          %s266 = sand.u32 %s103, 1
          %s267 = smul.addr %s266, 8
          %s268 = scalar_lea.vmem [#allocation7], %s267
          %270 = vsyncadd %s265, 0
          %s271 = smul.addr %s34, 8
          %s272 = scalar_lea.hbm %s2, %s271
          %s274 = sshll.u32 %s272, 4
          %s275 = int_to_ptr.hbm [resolvable:$true] %s274
          %s276 = sshll.u32 %s268, 4
          %s277 = int_to_ptr.vmem [resolvable:$true] %s276
          %279 = dma.hbm_to_vmem [thread:$0]  %s275, 128, %s277, %s265
        $region28: #{tpu_custom_call.1} parent=15 // pred_fallthru
          _
        // Predicated region
        $region29: #{tpu_custom_call.1} parent=15 // pred_check
          %p280 = pneg %p141
        $region30: #{tpu_custom_call.1} parent=15 // pred_check_branch
          %282 = sbr.rel (%p280) target = $region32
        $region31: #{tpu_custom_call.1} parent=15 // pred_region
          %s283 = sand.u32 %s131, 1
          %s284 = scalar_lea.sflag [#allocation9], %s283
          %s285 = sand.u32 %s131, 1
          %s286 = smul.addr %s285, 2
          %s287 = scalar_lea.vmem [#allocation8], %s286
          %289 = vsyncadd %s284, 0
          %s290 = sadd.s32 %s35, %s34
          %s291 = smul.addr %s290, 2
          %s292 = scalar_lea.hbm %s3, %s291
          %s294 = sshll.u32 %s292, 4
          %s295 = int_to_ptr.hbm [resolvable:$true] %s294
          %s296 = sshll.u32 %s287, 4
          %s297 = int_to_ptr.vmem [resolvable:$true] %s296
          %299 = dma.hbm_to_vmem [thread:$0]  %s295, 32, %s297, %s284
        $region32: #{tpu_custom_call.1} parent=15 // pred_fallthru
          _
      $region16: #{tpu_custom_call.1} parent=5 // pred_fallthru
        _
      %p300 = scmp.le.s32.totalorder 1, %s27
      %p301 = scmp.lt.s32.totalorder %s27, 3
      %p302 = pnand %p300, %p301
      %p303 = pneg %p302
      // Predicated region
      $region33: #{tpu_custom_call.1} parent=5 // pred_check
        _
      $region34: #{tpu_custom_call.1} parent=5 // pred_check_branch
        %305 = sbr.rel (%p302) target = $region36
      $region35: #{tpu_custom_call.1} parent=5 // pred_region
        %s306 = ssub.s32 %s27, 1
        %s307 = sand.u32 %s54, 1
        %s308 = scalar_lea.sflag [#allocation3], %s307
        %s309 = sand.u32 %s54, 1
        %s310 = smul.addr %s309, 8
        %s311 = scalar_lea.vmem [#allocation2], %s310
        // Predicated region
        $region37: #{tpu_custom_call.1} parent=35 // pred_check
          %p312 = pneg %p67
        $region38: #{tpu_custom_call.1} parent=35 // pred_check_branch
          %314 = sbr.rel (%p312) target = $region40
        $region39: #{tpu_custom_call.1} parent=35 // pred_region
          %316 = dma.done %s308, 128
        $region40: #{tpu_custom_call.1} parent=35 // pred_fallthru
          _
        %s317 = sand.u32 %s32, 1
        %s318 = scalar_lea.sflag [#allocation6], %s317
        %s319 = sand.u32 %s80, 1
        %s320 = smul.addr %s319, 8
        %s321 = scalar_lea.vmem [#allocation5], %s320
        // Predicated region
        $region41: #{tpu_custom_call.1} parent=35 // pred_check
          %p322 = pneg %p93
        $region42: #{tpu_custom_call.1} parent=35 // pred_check_branch
          %324 = sbr.rel (%p322) target = $region44
        $region43: #{tpu_custom_call.1} parent=35 // pred_region
          %326 = dma.done %s318, 128
        $region44: #{tpu_custom_call.1} parent=35 // pred_fallthru
          _
        %s327 = sand.u32 %s32, 1
        %s328 = scalar_lea.sflag [#allocation6], %s327
        %s329 = sand.u32 %s106, 1
        %s330 = smul.addr %s329, 8
        %s331 = scalar_lea.vmem [#allocation7], %s330
        // Predicated region
        $region45: #{tpu_custom_call.1} parent=35 // pred_check
          %p332 = pneg %p119
        $region46: #{tpu_custom_call.1} parent=35 // pred_check_branch
          %334 = sbr.rel (%p332) target = $region48
        $region47: #{tpu_custom_call.1} parent=35 // pred_region
          %336 = dma.done %s328, 128
        $region48: #{tpu_custom_call.1} parent=35 // pred_fallthru
          _
        %s337 = sand.u32 %s134, 1
        %s338 = scalar_lea.sflag [#allocation9], %s337
        %s339 = sand.u32 %s134, 1
        %s340 = smul.addr %s339, 2
        %s341 = scalar_lea.vmem [#allocation8], %s340
        // Predicated region
        $region49: #{tpu_custom_call.1} parent=35 // pred_check
          %p342 = pneg %p147
        $region50: #{tpu_custom_call.1} parent=35 // pred_check_branch
          %344 = sbr.rel (%p342) target = $region52
        $region51: #{tpu_custom_call.1} parent=35 // pred_region
          %346 = dma.done %s338, 32
        $region52: #{tpu_custom_call.1} parent=35 // pred_fallthru
          _
        %s347 = sand.u32 %s54, 1
        %s348 = scalar_lea.sflag [#allocation3], %s347
        %s349 = sand.u32 %s54, 1
        %s350 = smul.addr %s349, 8
        %s351 = scalar_lea.vmem [#allocation2], %s350
        %p352 = pneg %p67
        %p353 = pneg %p64
        %s354 = sand.u32 %s32, 1
        %s355 = scalar_lea.sflag [#allocation6], %s354
        %s356 = sand.u32 %s80, 1
        %s357 = smul.addr %s356, 8
        %s358 = scalar_lea.vmem [#allocation5], %s357
        %p359 = pneg %p93
        %p360 = pneg %p90
        %s361 = sand.u32 %s32, 1
        %s362 = scalar_lea.sflag [#allocation6], %s361
        %s363 = sand.u32 %s106, 1
        %s364 = smul.addr %s363, 8
        %s365 = scalar_lea.vmem [#allocation7], %s364
        %p366 = pneg %p119
        %p367 = pneg %p116
        %s368 = sand.u32 %s134, 1
        %s369 = scalar_lea.sflag [#allocation9], %s368
        %s370 = sand.u32 %s134, 1
        %s371 = smul.addr %s370, 2
        %s372 = scalar_lea.vmem [#allocation8], %s371
        %p373 = pneg %p147
        %p374 = pneg %p144
        %p375 = pneg %p175
        %p376 = pneg %p172
        %s377 = sand.u32 %s162, 1
        %s378 = scalar_lea.sflag [#allocation4], %s377
        %s379 = sand.u32 %s162, 1
        %s380 = smul.addr %s379, 8
        %s381 = scalar_lea.vmem [#allocation10], %s380
        %p382 = pneg %p203
        %p383 = pneg %p200
        %s384 = sand.u32 %s190, 1
        %s385 = scalar_lea.sflag [#allocation12], %s384
        %s386 = sand.u32 %s190, 1
        %s387 = smul.addr %s386, 4
        %s388 = scalar_lea.vmem [#allocation11], %s387
        %v391 = vld [vmem:[%s311] sm:$0xff]
        %v392 = vmul.f32 %v391, 0.17677669
        %v393 = vld [vmem:[%s321] sm:$0xff]
        %v394 = vld [vmem:[%s331] sm:$0xff]
        %vm395 = vcmask 261120
        %v397 = vsel %vm395, %v392, 0
        %v400 = vsel %vm395, %v393, 0
        %402 = vmatpush.xpose.msra.mxu0 0.0
        %403 = vmatpush.xpose.msra.mxu0 0.0
        %404 = vmatpush.xpose.msra.mxu0 0.0
        %405 = vmatpush.xpose.msra.mxu0 0.0
        %406 = vmatpush.xpose.msra.mxu0 0.0
        %407 = vmatpush.xpose.msra.mxu0 0.0
        %408 = vmatpush.xpose.msra.mxu0 0.0
        %409 = vmatpush.xpose.msra.mxu0 0.0
        %410 = vmatpush.xpose.msra.mxu0 0.0
        %411 = vmatpush.xpose.msra.mxu0 0.0
        %412 = vmatpush.xpose.msra.mxu0 0.0
        %413 = vmatpush.xpose.msra.mxu0 0.0
        %414 = vmatpush.xpose.msra.mxu0 0.0
        %415 = vmatpush.xpose.msra.mxu0 0.0
        %416 = vmatpush.xpose.msra.mxu0 0.0
        %417 = vmatpush.xpose.msra.mxu0 %v400
        %418 = vmatmul.f32.gmra.mxu0 %v397
        %v419 = vpop.f32.mrf.mxu0
        %v420 = vadd.f32 0.0, %v419
        %421 = vdwg.mxu0
        %v422 = vld [vmem:[%s341] sm:$0x3]
        %vm423 = vnez %v422
        %v424 = vsel %vm423, 16843009, 0
        %v425 = vunpack.c.0.s8 %v424
        %vm426 = vcmp.ne.s32.totalorder %v425, 0
        %v427 = vsel %vm426, -1e+30, %v420
        %vm428 = vcmask 64512
        %v429 = vsel %vm428, %v427, -inf
        %430 = vmax.xlane.f32.xlu0 %v429
        %v431 = vpop.xlane.xlu0 %430
        %v432 = vsub.f32 %v427, %v431
        %v433 = vmul.f32 %v432, 1.442695
        %v434 = vpow.pop %v433
        %v435 = vsel %vm428, %v434, 0.0
        %436 = vadd.xlane.f32.xlu0 %v435
        %v437 = vpop.xlane.xlu0 %436
        %v438 = vrcp.pop %v437
        %v439 = vmul.f32 %v437, %v438
        %v440 = vsub.f32 1.0, %v439
        %v441 = vmul.f32 %v438, %v440
        %v442 = vadd.f32 %v438, %v441
        %vm443 = vweird.f32 %v437
        %vm444 = vweird.f32 %v438
        %vm445 = vmor %vm443, %vm444
        %v446 = vsel %vm445, %v438, %v442
        %v447 = vand.u32 2147483647, %v437
        %vm448 = vcmp.eq.f32.partialorder %v447, 8.507059e+37
        %v449 = vand.u32 %v437, 2147483648
        %v450 = vor.u32 1.1754944e-38, %v449
        %v451 = vsel %vm448, %v450, %v446
        %v452 = vmul.f32 %v434, %v451
        %v454 = vsel %vm428, %v452, 0
        %456 = vmatpush.msra.mxu0 0.0
        %457 = vmatpush.msra.mxu0 0.0
        %458 = vmatpush.msra.mxu0 0.0
        %459 = vmatpush.msra.mxu0 0.0
        %460 = vmatpush.msra.mxu0 0.0
        %461 = vmatpush.msra.mxu0 0.0
        %462 = vmatpush.msra.mxu0 0.0
        %463 = vmatpush.msra.mxu0 0.0
        %464 = vmatpush.msra.mxu0 0.0
        %465 = vmatpush.msra.mxu0 0.0
        %466 = vmatpush.msra.mxu0 0.0
        %467 = vmatpush.msra.mxu0 0.0
        %468 = vmatpush.msra.mxu0 0.0
        %469 = vmatpush.msra.mxu0 0.0
        %470 = vmatpush.msra.mxu0 0.0
        %471 = vmatpush.msra.mxu0 %v394
        %472 = vmatmul.f32.gmra.mxu0 %v454
        %v473 = vpop.f32.mrf.mxu0
        %v474 = vadd.f32 0.0, %v473
        %475 = vdwg.mxu0
        %v476 = vpack.c.bf16 %v452, %v452
        %vm477 = vcmask 60416
        %478 = vst.msk [vmem:[%s388] sm:$0xf] %vm477, %v476
        %479 = vst.msk [vmem:[%s381] sm:$0xff] %vm395, %v474
        %s480 = sand.u32 %s162, 1
        %s481 = scalar_lea.sflag [#allocation4], %s480
        %s482 = sand.u32 %s162, 1
        %s483 = smul.addr %s482, 8
        %s484 = scalar_lea.vmem [#allocation10], %s483
        %s485 = sand.u32 %s190, 1
        %s486 = scalar_lea.sflag [#allocation12], %s485
        %s487 = sand.u32 %s190, 1
        %s488 = smul.addr %s487, 4
        %s489 = scalar_lea.vmem [#allocation11], %s488
        // Predicated region
        $region53: #{tpu_custom_call.1} parent=35 // pred_check
          %p490 = pneg %p172
        $region54: #{tpu_custom_call.1} parent=35 // pred_check_branch
          %492 = sbr.rel (%p490) target = $region56
        $region55: #{tpu_custom_call.1} parent=35 // pred_region
          %494 = vsyncadd %s481, 0
          %s495 = sadd.s32 %s37, %s36
          %s496 = smul.addr %s495, 8
          %s497 = scalar_lea.hbm %s4, %s496
          %s499 = sshll.u32 %s484, 4
          %s500 = int_to_ptr.vmem [resolvable:$true] %s499
          %s501 = sshll.u32 %s497, 4
          %s502 = int_to_ptr.hbm [resolvable:$true] %s501
          %504 = dma.vmem_to_hbm [thread:$0]  %s500, 128, %s502, %s481
        $region56: #{tpu_custom_call.1} parent=35 // pred_fallthru
          _
        // Predicated region
        $region57: #{tpu_custom_call.1} parent=35 // pred_check
          %p505 = pneg %p200
        $region58: #{tpu_custom_call.1} parent=35 // pred_check_branch
          %507 = sbr.rel (%p505) target = $region60
        $region59: #{tpu_custom_call.1} parent=35 // pred_region
          %509 = vsyncadd %s486, 0
          %s510 = sadd.s32 %s37, %s36
          %s511 = smul.addr %s510, 4
          %s512 = scalar_lea.hbm %s5, %s511
          %s514 = sshll.u32 %s489, 4
          %s515 = int_to_ptr.vmem [resolvable:$true] %s514
          %s516 = sshll.u32 %s512, 4
          %s517 = int_to_ptr.hbm [resolvable:$true] %s516
          %519 = dma.vmem_to_hbm [thread:$0]  %s515, 64, %s517, %s486
        $region60: #{tpu_custom_call.1} parent=35 // pred_fallthru
          _
      $region36: #{tpu_custom_call.1} parent=5 // pred_fallthru
        _
      %p520 = scmp.le.s32.totalorder 2, %s27
      // Predicated region
      $region61: #{tpu_custom_call.1} parent=5 // pred_check
        %p521 = pneg %p520
      $region62: #{tpu_custom_call.1} parent=5 // pred_check_branch
        %523 = sbr.rel (%p521) target = $region64
      $region63: #{tpu_custom_call.1} parent=5 // pred_region
        %s524 = ssub.s32 %s27, 2
        // Predicated region
        $region65: #{tpu_custom_call.1} parent=63 // pred_check
          %p525 = pneg %p178
        $region66: #{tpu_custom_call.1} parent=63 // pred_check_branch
          %527 = sbr.rel (%p525) target = $region68
        $region67: #{tpu_custom_call.1} parent=63 // pred_region
          %s528 = sand.u32 %s163, 1
          %s529 = scalar_lea.sflag [#allocation4], %s528
          %s530 = sand.u32 %s163, 1
          %s531 = smul.addr %s530, 8
          %s532 = scalar_lea.vmem [#allocation10], %s531
          %534 = dma.done %s529, 128
        $region68: #{tpu_custom_call.1} parent=63 // pred_fallthru
          _
        // Predicated region
        $region69: #{tpu_custom_call.1} parent=63 // pred_check
          %p535 = pneg %p206
        $region70: #{tpu_custom_call.1} parent=63 // pred_check_branch
          %537 = sbr.rel (%p535) target = $region72
        $region71: #{tpu_custom_call.1} parent=63 // pred_region
          %s538 = sand.u32 %s191, 1
          %s539 = scalar_lea.sflag [#allocation12], %s538
          %s540 = sand.u32 %s191, 1
          %s541 = smul.addr %s540, 4
          %s542 = scalar_lea.vmem [#allocation11], %s541
          %544 = dma.done %s539, 64
        $region72: #{tpu_custom_call.1} parent=63 // pred_fallthru
          _
      $region64: #{tpu_custom_call.1} parent=5 // pred_fallthru
        _
    $region6: #{tpu_custom_call.1} parent=1 // loop_footer
      %s31 = sadd.s32 1, %s27
    $region7: #{tpu_custom_call.1} parent=1 // loop_footer_branch
      %26 = sbr.rel target = $region3
    $region8: #{tpu_custom_call.1} parent=1 // loop_exit
      _
    %545 = vsyncpa [#allocation3], 1
    %s546 = scalar_lea.sflag [#allocation3], 1
    %547 = vsyncpa %s546, 1
    %548 = vsyncpa [#allocation6], 1
    %s549 = scalar_lea.sflag [#allocation6], 1
    %550 = vsyncpa %s549, 1
    %551 = vsyncpa [#allocation9], 1
    %s552 = scalar_lea.sflag [#allocation9], 1
    %553 = vsyncpa %s552, 1
    %554 = vsyncpa [#allocation4], 1
    %s555 = scalar_lea.sflag [#allocation4], 1
    %556 = vsyncpa %s555, 1
    %557 = vsyncpa [#allocation12], 1
    %s558 = scalar_lea.sflag [#allocation12], 1
    %559 = vsyncpa %s558, 1

</llo_original>
